<compile_context>
chip_gen: v7x
topology: tpu7x:2x2x1
jax: 0.10.0
libtpu: 0.0.40
codegen_flags: <defaults>
</compile_context>

<pallas_src>
import functools

import jax
import jax.numpy as jnp
from jax.experimental import pallas as pl
from jax.experimental.pallas import tpu as pltpu


def _encoder_layers_kernel(
    x_ref, maskadd_ref,
    wqkv_ref, wo_ref, bo_ref, g1_ref, be1_ref,
    w1_ref, b1_ref, w2_ref, b2_ref, g2_ref, be2_ref,
    out_ref,
    ctx_ref,
    *, heads, head_dim, embed_dim, eps=1e-5,
):
    H, hd, E = heads, head_dim, embed_dim

    x = x_ref[0]                               # (S, E) f32 embeddings
    mask_add = maskadd_ref[0]                  # (1, S) f32: 0 = keep, -1e20 = masked key
    inv_scale = jnp.float32(1.0 / (float(E) ** 0.5))   # reference scales by sqrt(embed_dim)

    # ---- fused Q|K|V projection: ONE wide MXU matmul (S,E) @ (E,3E), bf16 in / f32 acc ----
    xb = x.astype(jnp.bfloat16)
    qkv = jnp.dot(xb, wqkv_ref[0], preferred_element_type=jnp.float32)   # (S, 3E) f32

    # ---- per-head attention (head_dim << 128 here; heads statically unrolled) ----
    for h in range(H):
        lo = h * hd
        qh = qkv[:, lo:lo + hd].astype(jnp.bfloat16)                 # (S, hd)
        kh = qkv[:, E + lo:E + lo + hd].astype(jnp.bfloat16)         # (S, hd)
        vh = qkv[:, 2 * E + lo:2 * E + lo + hd].astype(jnp.bfloat16)  # (S, hd)

        energy = jnp.einsum('qd,kd->qk', qh, kh,
                            preferred_element_type=jnp.float32)      # (S, S)
        # reference order: mask first, then divide by sqrt(embed_dim)
        energy = (energy + mask_add) * inv_scale
        energy = energy - jnp.max(energy, axis=-1, keepdims=True)    # stable softmax
        p = jnp.exp(energy)
        attn = p * pl.reciprocal(jnp.sum(p, axis=-1, keepdims=True), approx=True)

        ctx_h = jnp.dot(attn.astype(jnp.bfloat16), vh,
                        preferred_element_type=jnp.float32)          # (S, hd)
        ctx_ref[:, lo:lo + hd] = ctx_h                               # assemble in VMEM scratch

    ctx = ctx_ref[...]                                               # (S, E) f32
    attn_out = jnp.dot(ctx.astype(jnp.bfloat16), wo_ref[0],
                       preferred_element_type=jnp.float32) + bo_ref[0]

    # ---- residual + LayerNorm 1 (dropout = identity) ----
    y = attn_out + x
    mu = jnp.mean(y, axis=-1, keepdims=True)
    var = jnp.mean((y - mu) * (y - mu), axis=-1, keepdims=True)
    y = (y - mu) * jax.lax.rsqrt(var + eps) * g1_ref[0] + be1_ref[0]

    # ---- feed-forward: Linear -> ReLU -> Linear (pre-transposed bf16 weights) ----
    yb = y.astype(jnp.bfloat16)
    hdn = jnp.dot(yb, w1_ref[0], preferred_element_type=jnp.float32) + b1_ref[0]
    hdn = jnp.maximum(hdn, 0.0)
    f = jnp.dot(hdn.astype(jnp.bfloat16), w2_ref[0],
                preferred_element_type=jnp.float32) + b2_ref[0]

    # ---- residual + LayerNorm 2 (dropout = identity) ----
    z = y + f
    mu2 = jnp.mean(z, axis=-1, keepdims=True)
    var2 = jnp.mean((z - mu2) * (z - mu2), axis=-1, keepdims=True)
    out_ref[0] = (z - mu2) * jax.lax.rsqrt(var2 + eps) * g2_ref[0] + be2_ref[0]


_WKEYS = ('wqkv', 'wo_t', 'bo', 'g1', 'be1', 'w1_t', 'b1', 'w2_t', 'b2', 'g2', 'be2')


def _stack_layers(layers, *, heads):
    """Fuse/pre-transpose per-layer weights and stack along a leading layer axis."""
    fused = []
    eye = jnp.eye(heads, dtype=jnp.float32)
    for lp in layers:
        # block-diagonal (E,E) projections (shared per-head weight), fused Q|K|V -> (E, 3E)
        wq_big = jnp.kron(eye, lp['wq'].T)
        wk_big = jnp.kron(eye, lp['wk'].T)
        wv_big = jnp.kron(eye, lp['wv'].T)
        fused.append({
            'wqkv': jnp.concatenate([wq_big, wk_big, wv_big], axis=1).astype(jnp.bfloat16),
            'wo_t': lp['wo'].T.astype(jnp.bfloat16),     # (E, E), contracting dim leading
            'bo': lp['bo'],
            'g1': lp['g1'], 'be1': lp['be1'],
            'w1_t': lp['w1'].T.astype(jnp.bfloat16),     # (E, hidden)
            'b1': lp['b1'],
            'w2_t': lp['w2'].T.astype(jnp.bfloat16),     # (hidden, E)
            'b2': lp['b2'],
            'g2': lp['g2'], 'be2': lp['be2'],
        })
    return {k: jnp.stack([f[k] for f in fused], axis=0) for k in _WKEYS}


def encoder_stack(embeddings, mask_add, stacked, *, heads):
    """embeddings: (N,S,E) f32; mask_add: (N,1,S) f32 additive mask (0 keep / -1e20 masked).
    Runs all L encoder layers (each consuming `embeddings`, per the reference) in one
    pallas_call; returns the last layer's output (N,S,E) f32."""
    N, S, E = embeddings.shape
    L = stacked['wqkv'].shape[0]
    hidden = stacked['w1_t'].shape[-1]
    head_dim = E // heads

    kernel = functools.partial(_encoder_layers_kernel, heads=heads,
                               head_dim=head_dim, embed_dim=E)

    def wspec(arr):
        rest = arr.shape[1:]
        zeros = (0,) * len(rest)
        return pl.BlockSpec((1,) + rest, lambda n, l, _z=zeros: (l,) + _z)

    in_specs = [
        pl.BlockSpec((1, S, E), lambda n, l: (n, 0, 0)),   # embeddings: one batch slab
        pl.BlockSpec((1, 1, S), lambda n, l: (n, 0, 0)),   # additive key mask
    ] + [wspec(stacked[k]) for k in _WKEYS]                # layer-indexed weights

    # advisory cost estimate (per batch element, per layer)
    flops_step = 2 * S * E * 3 * E + 4 * S * S * E + 2 * S * E * E + 4 * S * E * hidden
    flops = int(N * L * flops_step)
    transc = int(N * L * (heads * S * S + heads * S + 2 * S))
    weight_bytes = sum(int(a.size) * a.dtype.itemsize for a in stacked.values())
    bytes_acc = int(N * weight_bytes + 2 * N * S * E * 4 + N * S * 4)

    return pl.pallas_call(
        kernel,
        out_shape=jax.ShapeDtypeStruct((N, S, E), jnp.float32),
        grid=(N, L),
        in_specs=in_specs,
        out_specs=pl.BlockSpec((1, S, E), lambda n, l: (n, 0, 0)),
        scratch_shapes=[pltpu.VMEM((S, E), jnp.float32)],   # per-step context slab
        compiler_params=pltpu.CompilerParams(
            dimension_semantics=("parallel", "arbitrary"),
            vmem_limit_bytes=32 * 1024 * 1024,
        ),
        cost_estimate=pl.CostEstimate(flops=flops, transcendentals=transc,
                                      bytes_accessed=bytes_acc),
    )(embeddings, mask_add, *(stacked[k] for k in _WKEYS))


def init_params(key, *, vocab, max_len, embed_dim, heads, num_layers, forward_exp):
    head_dim = embed_dim // heads
    hidden = embed_dim * forward_exp
    keys = jax.random.split(key, 2 + num_layers)
    params = {
        'token_emb': 0.02 * jax.random.normal(keys[0], (vocab, embed_dim), jnp.float32),
        'pos_emb': 0.02 * jax.random.normal(keys[1], (max_len, embed_dim), jnp.float32),
        'layers': [],
    }
    for l in range(num_layers):
        k = jax.random.split(keys[2 + l], 6)
        params['layers'].append({
            'wq': 0.1 * jax.random.normal(k[0], (head_dim, head_dim), jnp.float32),
            'wk': 0.1 * jax.random.normal(k[1], (head_dim, head_dim), jnp.float32),
            'wv': 0.1 * jax.random.normal(k[2], (head_dim, head_dim), jnp.float32),
            'wo': 0.1 * jax.random.normal(k[3], (embed_dim, embed_dim), jnp.float32),
            'bo': jnp.zeros((1, embed_dim), jnp.float32),
            'g1': jnp.ones((1, embed_dim), jnp.float32),
            'be1': jnp.zeros((1, embed_dim), jnp.float32),
            'w1': 0.1 * jax.random.normal(k[4], (hidden, embed_dim), jnp.float32),
            'b1': jnp.zeros((1, hidden), jnp.float32),
            'w2': 0.1 * jax.random.normal(k[5], (embed_dim, hidden), jnp.float32),
            'b2': jnp.zeros((1, embed_dim), jnp.float32),
            'g2': jnp.ones((1, embed_dim), jnp.float32),
            'be2': jnp.zeros((1, embed_dim), jnp.float32),
        })
    return params


def encoder_forward(src_token, mask, params, *, heads):
    """src_token: (N,S) int32; mask: (N,1,S) f32 with 1=keep, 0=masked key."""
    N, S = src_token.shape
    tok = jnp.take(params['token_emb'], src_token, axis=0)           # (N, S, E)
    pos = params['pos_emb'][:S][None]                                # (1, S, E)
    embeddings = tok + pos
    # Additive mask: 0 where keep, -1e20 where masked (no in-kernel compare/select).
    mask_add = (mask - 1.0) * jnp.float32(1e20)
    stacked = _stack_layers(params['layers'], heads=heads)
    # Faithful to the reference: every layer consumes `embeddings`; only the last
    # layer's output is returned (the fused kernel overwrites the output per layer).
    return encoder_stack(embeddings, mask_add, stacked, heads=heads)


if __name__ == "__main__":
    VOCAB, MAXLEN = 50, 16
    N, S, E, H, L, FE = 2, 8, 32, 4, 2, 4

    key = jax.random.PRNGKey(0)
    pkey, tkey = jax.random.split(key)
    params = init_params(pkey, vocab=VOCAB, max_len=MAXLEN, embed_dim=E,
                         heads=H, num_layers=L, forward_exp=FE)

    src = jax.random.randint(tkey, (N, S), 1, VOCAB, dtype=jnp.int32)
    src = src.at[1, 6:].set(0)                                  # pad tail of seq 1
    mask = (src != 0).astype(jnp.float32).reshape(N, 1, S)      # (N, 1, S): 1 = keep

    out = encoder_forward(src, mask, params, heads=H)
    out = jax.block_until_ready(out)
    assert out.shape == (N, S, E)
    assert bool(jnp.all(jnp.isfinite(out)))
    print("KERNEL_OK")
</pallas_src>

<mosaic_0001>
module attributes {stable_mosaic.version = 11 : i64} {
  func.func @_encoder_layers_kernel(%arg0: i32, %arg1: i32, %arg2: memref<1x8x32xf32, #tpu.memory_space<vmem>>, %arg3: memref<1x1x8xf32, #tpu.memory_space<vmem>>, %arg4: memref<1x32x96xbf16, #tpu.memory_space<vmem>>, %arg5: memref<1x32x32xbf16, #tpu.memory_space<vmem>>, %arg6: memref<1x1x32xf32, #tpu.memory_space<vmem>>, %arg7: memref<1x1x32xf32, #tpu.memory_space<vmem>>, %arg8: memref<1x1x32xf32, #tpu.memory_space<vmem>>, %arg9: memref<1x32x128xbf16, #tpu.memory_space<vmem>>, %arg10: memref<1x1x128xf32, #tpu.memory_space<vmem>>, %arg11: memref<1x128x32xbf16, #tpu.memory_space<vmem>>, %arg12: memref<1x1x32xf32, #tpu.memory_space<vmem>>, %arg13: memref<1x1x32xf32, #tpu.memory_space<vmem>>, %arg14: memref<1x1x32xf32, #tpu.memory_space<vmem>>, %arg15: memref<1x8x32xf32, #tpu.memory_space<vmem>>, %arg16: memref<8x32xf32, #tpu.memory_space<vmem>>) attributes {dimension_semantics = [#tpu.dimension_semantics<parallel>, #tpu.dimension_semantics<arbitrary>], iteration_bounds = array<i64: 2, 2>, scalar_prefetch = 0 : i64, scratch_operands = 1 : i64, tpu.core_type = #tpu.core_type<tc>, window_params = [{transform_indices = @transform_0, window_bounds = array<i64: 1, 8, 32>}, {transform_indices = @transform_1, window_bounds = array<i64: 1, 1, 8>}, {transform_indices = @transform_2, window_bounds = array<i64: 1, 32, 96>}, {transform_indices = @transform_3, window_bounds = array<i64: 1, 32, 32>}, {transform_indices = @transform_4, window_bounds = array<i64: 1, 1, 32>}, {transform_indices = @transform_5, window_bounds = array<i64: 1, 1, 32>}, {transform_indices = @transform_6, window_bounds = array<i64: 1, 1, 32>}, {transform_indices = @transform_7, window_bounds = array<i64: 1, 32, 128>}, {transform_indices = @transform_8, window_bounds = array<i64: 1, 1, 128>}, {transform_indices = @transform_9, window_bounds = array<i64: 1, 128, 32>}, {transform_indices = @transform_10, window_bounds = array<i64: 1, 1, 32>}, {transform_indices = @transform_11, window_bounds = array<i64: 1, 1, 32>}, {transform_indices = @transform_12, window_bounds = array<i64: 1, 1, 32>}, {transform_indices = @transform_13, window_bounds = array<i64: 1, 8, 32>}]} {
    %c0 = arith.constant 0 : index
    %c0_0 = arith.constant 0 : index
    %c0_1 = arith.constant 0 : index
    %0 = vector.load %arg2[%c0, %c0_0, %c0_1] : memref<1x8x32xf32, #tpu.memory_space<vmem>>, vector<1x8x32xf32>
    %1 = vector.shape_cast %0 : vector<1x8x32xf32> to vector<8x32xf32>
    %c0_2 = arith.constant 0 : index
    %c0_3 = arith.constant 0 : index
    %c0_4 = arith.constant 0 : index
    %2 = vector.load %arg3[%c0_2, %c0_3, %c0_4] : memref<1x1x8xf32, #tpu.memory_space<vmem>>, vector<1x1x8xf32>
    %3 = vector.shape_cast %2 : vector<1x1x8xf32> to vector<1x8xf32>
    %4 = arith.truncf %1 : vector<8x32xf32> to vector<8x32xbf16>
    %c0_5 = arith.constant 0 : index
    %c0_6 = arith.constant 0 : index
    %c0_7 = arith.constant 0 : index
    %5 = vector.load %arg4[%c0_5, %c0_6, %c0_7] : memref<1x32x96xbf16, #tpu.memory_space<vmem>>, vector<1x32x96xbf16>
    %6 = vector.shape_cast %5 : vector<1x32x96xbf16> to vector<32x96xbf16>
    %cst = arith.constant dense<0.000000e+00> : vector<8x96xf32>
    %7 = tpu.matmul %4, %6, %cst {dimension_numbers = #tpu.dot_dimension_numbers<[1], [0], [0], [1], [0, 0, 1, 1], [], []>} : vector<8x32xbf16>, vector<32x96xbf16>, vector<8x96xf32> -> vector<8x96xf32>
    %8 = vector.extract_strided_slice %7 {offsets = [0, 0], sizes = [8, 8], strides = [1, 1]} : vector<8x96xf32> to vector<8x8xf32>
    %9 = arith.truncf %8 : vector<8x8xf32> to vector<8x8xbf16>
    %10 = vector.extract_strided_slice %7 {offsets = [0, 32], sizes = [8, 8], strides = [1, 1]} : vector<8x96xf32> to vector<8x8xf32>
    %11 = arith.truncf %10 : vector<8x8xf32> to vector<8x8xbf16>
    %12 = vector.extract_strided_slice %7 {offsets = [0, 64], sizes = [8, 8], strides = [1, 1]} : vector<8x96xf32> to vector<8x8xf32>
    %13 = arith.truncf %12 : vector<8x8xf32> to vector<8x8xbf16>
    "tpu.trace_start"() <{level = 10 : i32, message = "qd,kd->qk"}> : () -> ()
    %cst_8 = arith.constant dense<0.000000e+00> : vector<8x8xf32>
    %14 = tpu.matmul %9, %11, %cst_8 {dimension_numbers = #tpu.dot_dimension_numbers<[1], [1], [0], [0], [0, 0, 1, 0], [], []>} : vector<8x8xbf16>, vector<8x8xbf16>, vector<8x8xf32> -> vector<8x8xf32>
    "tpu.trace_stop"() : () -> ()
    %15 = vector.broadcast %3 : vector<1x8xf32> to vector<8x8xf32>
    %16 = arith.addf %14, %15 : vector<8x8xf32>
    %cst_9 = arith.constant 0.176776692 : f32
    %17 = vector.broadcast %cst_9 : f32 to vector<8x8xf32>
    %18 = arith.mulf %16, %17 : vector<8x8xf32>
    %cst_10 = arith.constant dense<0xFF800000> : vector<8xf32>
    %19 = vector.multi_reduction <maximumf>, %18, %cst_10 [1] : vector<8x8xf32> to vector<8xf32>
    %20 = vector.shape_cast %19 : vector<8xf32> to vector<8x1xf32>
    %21 = vector.broadcast %20 : vector<8x1xf32> to vector<8x8xf32>
    %22 = arith.subf %18, %21 : vector<8x8xf32>
    %23 = math.exp %22 : vector<8x8xf32>
    %cst_11 = arith.constant dense<0.000000e+00> : vector<8xf32>
    %24 = vector.multi_reduction <add>, %23, %cst_11 [1] : vector<8x8xf32> to vector<8xf32>
    %25 = vector.shape_cast %24 : vector<8xf32> to vector<8x1xf32>
    %26 = tpu.reciprocal %25 {approx = true} : vector<8x1xf32> -> vector<8x1xf32>
    %27 = vector.broadcast %26 : vector<8x1xf32> to vector<8x8xf32>
    %28 = arith.mulf %23, %27 : vector<8x8xf32>
    %29 = arith.truncf %28 : vector<8x8xf32> to vector<8x8xbf16>
    %cst_12 = arith.constant dense<0.000000e+00> : vector<8x8xf32>
    %30 = tpu.matmul %29, %13, %cst_12 {dimension_numbers = #tpu.dot_dimension_numbers<[1], [0], [0], [1], [0, 0, 1, 1], [], []>} : vector<8x8xbf16>, vector<8x8xbf16>, vector<8x8xf32> -> vector<8x8xf32>
    %c0_13 = arith.constant 0 : index
    %c0_14 = arith.constant 0 : index
    %31 = vector.load %arg16[%c0_13, %c0_14] : memref<8x32xf32, #tpu.memory_space<vmem>>, vector<8x8xf32>
    tpu.vector_store %arg16[%c0_13, %c0_14], %30 {strides = array<i32>} : memref<8x32xf32, #tpu.memory_space<vmem>>, vector<8x8xf32>,
    %32 = vector.extract_strided_slice %7 {offsets = [0, 8], sizes = [8, 8], strides = [1, 1]} : vector<8x96xf32> to vector<8x8xf32>
    %33 = arith.truncf %32 : vector<8x8xf32> to vector<8x8xbf16>
    %34 = vector.extract_strided_slice %7 {offsets = [0, 40], sizes = [8, 8], strides = [1, 1]} : vector<8x96xf32> to vector<8x8xf32>
    %35 = arith.truncf %34 : vector<8x8xf32> to vector<8x8xbf16>
    %36 = vector.extract_strided_slice %7 {offsets = [0, 72], sizes = [8, 8], strides = [1, 1]} : vector<8x96xf32> to vector<8x8xf32>
    %37 = arith.truncf %36 : vector<8x8xf32> to vector<8x8xbf16>
    "tpu.trace_start"() <{level = 10 : i32, message = "qd,kd->qk"}> : () -> ()
    %cst_15 = arith.constant dense<0.000000e+00> : vector<8x8xf32>
    %38 = tpu.matmul %33, %35, %cst_15 {dimension_numbers = #tpu.dot_dimension_numbers<[1], [1], [0], [0], [0, 0, 1, 0], [], []>} : vector<8x8xbf16>, vector<8x8xbf16>, vector<8x8xf32> -> vector<8x8xf32>
    "tpu.trace_stop"() : () -> ()
    %39 = vector.broadcast %3 : vector<1x8xf32> to vector<8x8xf32>
    %40 = arith.addf %38, %39 : vector<8x8xf32>
    %cst_16 = arith.constant 0.176776692 : f32
    %41 = vector.broadcast %cst_16 : f32 to vector<8x8xf32>
    %42 = arith.mulf %40, %41 : vector<8x8xf32>
    %cst_17 = arith.constant dense<0xFF800000> : vector<8xf32>
    %43 = vector.multi_reduction <maximumf>, %42, %cst_17 [1] : vector<8x8xf32> to vector<8xf32>
    %44 = vector.shape_cast %43 : vector<8xf32> to vector<8x1xf32>
    %45 = vector.broadcast %44 : vector<8x1xf32> to vector<8x8xf32>
    %46 = arith.subf %42, %45 : vector<8x8xf32>
    %47 = math.exp %46 : vector<8x8xf32>
    %cst_18 = arith.constant dense<0.000000e+00> : vector<8xf32>
    %48 = vector.multi_reduction <add>, %47, %cst_18 [1] : vector<8x8xf32> to vector<8xf32>
    %49 = vector.shape_cast %48 : vector<8xf32> to vector<8x1xf32>
    %50 = tpu.reciprocal %49 {approx = true} : vector<8x1xf32> -> vector<8x1xf32>
    %51 = vector.broadcast %50 : vector<8x1xf32> to vector<8x8xf32>
    %52 = arith.mulf %47, %51 : vector<8x8xf32>
    %53 = arith.truncf %52 : vector<8x8xf32> to vector<8x8xbf16>
    %cst_19 = arith.constant dense<0.000000e+00> : vector<8x8xf32>
    %54 = tpu.matmul %53, %37, %cst_19 {dimension_numbers = #tpu.dot_dimension_numbers<[1], [0], [0], [1], [0, 0, 1, 1], [], []>} : vector<8x8xbf16>, vector<8x8xbf16>, vector<8x8xf32> -> vector<8x8xf32>
    %c0_20 = arith.constant 0 : index
    %c8 = arith.constant 8 : index
    %55 = vector.load %arg16[%c0_20, %c8] : memref<8x32xf32, #tpu.memory_space<vmem>>, vector<8x8xf32>
    tpu.vector_store %arg16[%c0_20, %c8], %54 {strides = array<i32>} : memref<8x32xf32, #tpu.memory_space<vmem>>, vector<8x8xf32>,
    %56 = vector.extract_strided_slice %7 {offsets = [0, 16], sizes = [8, 8], strides = [1, 1]} : vector<8x96xf32> to vector<8x8xf32>
    %57 = arith.truncf %56 : vector<8x8xf32> to vector<8x8xbf16>
    %58 = vector.extract_strided_slice %7 {offsets = [0, 48], sizes = [8, 8], strides = [1, 1]} : vector<8x96xf32> to vector<8x8xf32>
    %59 = arith.truncf %58 : vector<8x8xf32> to vector<8x8xbf16>
    %60 = vector.extract_strided_slice %7 {offsets = [0, 80], sizes = [8, 8], strides = [1, 1]} : vector<8x96xf32> to vector<8x8xf32>
    %61 = arith.truncf %60 : vector<8x8xf32> to vector<8x8xbf16>
    "tpu.trace_start"() <{level = 10 : i32, message = "qd,kd->qk"}> : () -> ()
    %cst_21 = arith.constant dense<0.000000e+00> : vector<8x8xf32>
    %62 = tpu.matmul %57, %59, %cst_21 {dimension_numbers = #tpu.dot_dimension_numbers<[1], [1], [0], [0], [0, 0, 1, 0], [], []>} : vector<8x8xbf16>, vector<8x8xbf16>, vector<8x8xf32> -> vector<8x8xf32>
    "tpu.trace_stop"() : () -> ()
    %63 = vector.broadcast %3 : vector<1x8xf32> to vector<8x8xf32>
    %64 = arith.addf %62, %63 : vector<8x8xf32>
    %cst_22 = arith.constant 0.176776692 : f32
    %65 = vector.broadcast %cst_22 : f32 to vector<8x8xf32>
    %66 = arith.mulf %64, %65 : vector<8x8xf32>
    %cst_23 = arith.constant dense<0xFF800000> : vector<8xf32>
    %67 = vector.multi_reduction <maximumf>, %66, %cst_23 [1] : vector<8x8xf32> to vector<8xf32>
    %68 = vector.shape_cast %67 : vector<8xf32> to vector<8x1xf32>
    %69 = vector.broadcast %68 : vector<8x1xf32> to vector<8x8xf32>
    %70 = arith.subf %66, %69 : vector<8x8xf32>
    %71 = math.exp %70 : vector<8x8xf32>
    %cst_24 = arith.constant dense<0.000000e+00> : vector<8xf32>
    %72 = vector.multi_reduction <add>, %71, %cst_24 [1] : vector<8x8xf32> to vector<8xf32>
    %73 = vector.shape_cast %72 : vector<8xf32> to vector<8x1xf32>
    %74 = tpu.reciprocal %73 {approx = true} : vector<8x1xf32> -> vector<8x1xf32>
    %75 = vector.broadcast %74 : vector<8x1xf32> to vector<8x8xf32>
    %76 = arith.mulf %71, %75 : vector<8x8xf32>
    %77 = arith.truncf %76 : vector<8x8xf32> to vector<8x8xbf16>
    %cst_25 = arith.constant dense<0.000000e+00> : vector<8x8xf32>
    %78 = tpu.matmul %77, %61, %cst_25 {dimension_numbers = #tpu.dot_dimension_numbers<[1], [0], [0], [1], [0, 0, 1, 1], [], []>} : vector<8x8xbf16>, vector<8x8xbf16>, vector<8x8xf32> -> vector<8x8xf32>
    %c0_26 = arith.constant 0 : index
    %c16 = arith.constant 16 : index
    %79 = vector.load %arg16[%c0_26, %c16] : memref<8x32xf32, #tpu.memory_space<vmem>>, vector<8x8xf32>
    tpu.vector_store %arg16[%c0_26, %c16], %78 {strides = array<i32>} : memref<8x32xf32, #tpu.memory_space<vmem>>, vector<8x8xf32>,
    %80 = vector.extract_strided_slice %7 {offsets = [0, 24], sizes = [8, 8], strides = [1, 1]} : vector<8x96xf32> to vector<8x8xf32>
    %81 = arith.truncf %80 : vector<8x8xf32> to vector<8x8xbf16>
    %82 = vector.extract_strided_slice %7 {offsets = [0, 56], sizes = [8, 8], strides = [1, 1]} : vector<8x96xf32> to vector<8x8xf32>
    %83 = arith.truncf %82 : vector<8x8xf32> to vector<8x8xbf16>
    %84 = vector.extract_strided_slice %7 {offsets = [0, 88], sizes = [8, 8], strides = [1, 1]} : vector<8x96xf32> to vector<8x8xf32>
    %85 = arith.truncf %84 : vector<8x8xf32> to vector<8x8xbf16>
    "tpu.trace_start"() <{level = 10 : i32, message = "qd,kd->qk"}> : () -> ()
    %cst_27 = arith.constant dense<0.000000e+00> : vector<8x8xf32>
    %86 = tpu.matmul %81, %83, %cst_27 {dimension_numbers = #tpu.dot_dimension_numbers<[1], [1], [0], [0], [0, 0, 1, 0], [], []>} : vector<8x8xbf16>, vector<8x8xbf16>, vector<8x8xf32> -> vector<8x8xf32>
    "tpu.trace_stop"() : () -> ()
    %87 = vector.broadcast %3 : vector<1x8xf32> to vector<8x8xf32>
    %88 = arith.addf %86, %87 : vector<8x8xf32>
    %cst_28 = arith.constant 0.176776692 : f32
    %89 = vector.broadcast %cst_28 : f32 to vector<8x8xf32>
    %90 = arith.mulf %88, %89 : vector<8x8xf32>
    %cst_29 = arith.constant dense<0xFF800000> : vector<8xf32>
    %91 = vector.multi_reduction <maximumf>, %90, %cst_29 [1] : vector<8x8xf32> to vector<8xf32>
    %92 = vector.shape_cast %91 : vector<8xf32> to vector<8x1xf32>
    %93 = vector.broadcast %92 : vector<8x1xf32> to vector<8x8xf32>
    %94 = arith.subf %90, %93 : vector<8x8xf32>
    %95 = math.exp %94 : vector<8x8xf32>
    %cst_30 = arith.constant dense<0.000000e+00> : vector<8xf32>
    %96 = vector.multi_reduction <add>, %95, %cst_30 [1] : vector<8x8xf32> to vector<8xf32>
    %97 = vector.shape_cast %96 : vector<8xf32> to vector<8x1xf32>
    %98 = tpu.reciprocal %97 {approx = true} : vector<8x1xf32> -> vector<8x1xf32>
    %99 = vector.broadcast %98 : vector<8x1xf32> to vector<8x8xf32>
    %100 = arith.mulf %95, %99 : vector<8x8xf32>
    %101 = arith.truncf %100 : vector<8x8xf32> to vector<8x8xbf16>
    %cst_31 = arith.constant dense<0.000000e+00> : vector<8x8xf32>
    %102 = tpu.matmul %101, %85, %cst_31 {dimension_numbers = #tpu.dot_dimension_numbers<[1], [0], [0], [1], [0, 0, 1, 1], [], []>} : vector<8x8xbf16>, vector<8x8xbf16>, vector<8x8xf32> -> vector<8x8xf32>
    %c0_32 = arith.constant 0 : index
    %c24 = arith.constant 24 : index
    %103 = vector.load %arg16[%c0_32, %c24] : memref<8x32xf32, #tpu.memory_space<vmem>>, vector<8x8xf32>
    tpu.vector_store %arg16[%c0_32, %c24], %102 {strides = array<i32>} : memref<8x32xf32, #tpu.memory_space<vmem>>, vector<8x8xf32>,
    %c0_33 = arith.constant 0 : index
    %c0_34 = arith.constant 0 : index
    %104 = vector.load %arg16[%c0_33, %c0_34] : memref<8x32xf32, #tpu.memory_space<vmem>>, vector<8x32xf32>
    %105 = arith.truncf %104 : vector<8x32xf32> to vector<8x32xbf16>
    %c0_35 = arith.constant 0 : index
    %c0_36 = arith.constant 0 : index
    %c0_37 = arith.constant 0 : index
    %106 = vector.load %arg5[%c0_35, %c0_36, %c0_37] : memref<1x32x32xbf16, #tpu.memory_space<vmem>>, vector<1x32x32xbf16>
    %107 = vector.shape_cast %106 : vector<1x32x32xbf16> to vector<32x32xbf16>
    %cst_38 = arith.constant dense<0.000000e+00> : vector<8x32xf32>
    %108 = tpu.matmul %105, %107, %cst_38 {dimension_numbers = #tpu.dot_dimension_numbers<[1], [0], [0], [1], [0, 0, 1, 1], [], []>} : vector<8x32xbf16>, vector<32x32xbf16>, vector<8x32xf32> -> vector<8x32xf32>
    %c0_39 = arith.constant 0 : index
    %c0_40 = arith.constant 0 : index
    %c0_41 = arith.constant 0 : index
    %109 = vector.load %arg6[%c0_39, %c0_40, %c0_41] : memref<1x1x32xf32, #tpu.memory_space<vmem>>, vector<1x1x32xf32>
    %110 = vector.shape_cast %109 : vector<1x1x32xf32> to vector<1x32xf32>
    %111 = vector.broadcast %110 : vector<1x32xf32> to vector<8x32xf32>
    %112 = arith.addf %108, %111 : vector<8x32xf32>
    %113 = arith.addf %112, %1 : vector<8x32xf32>
    %cst_42 = arith.constant dense<0.000000e+00> : vector<8xf32>
    %114 = vector.multi_reduction <add>, %113, %cst_42 [1] : vector<8x32xf32> to vector<8xf32>
    %115 = vector.shape_cast %114 : vector<8xf32> to vector<8x1xf32>
    %cst_43 = arith.constant 3.200000e+01 : f32
    %116 = vector.broadcast %cst_43 : f32 to vector<8x1xf32>
    %117 = arith.divf %115, %116 : vector<8x1xf32>
    %118 = vector.broadcast %117 : vector<8x1xf32> to vector<8x32xf32>
    %119 = arith.subf %113, %118 : vector<8x32xf32>
    %120 = vector.broadcast %117 : vector<8x1xf32> to vector<8x32xf32>
    %121 = arith.subf %113, %120 : vector<8x32xf32>
    %122 = arith.mulf %119, %121 : vector<8x32xf32>
    %cst_44 = arith.constant dense<0.000000e+00> : vector<8xf32>
    %123 = vector.multi_reduction <add>, %122, %cst_44 [1] : vector<8x32xf32> to vector<8xf32>
    %124 = vector.shape_cast %123 : vector<8xf32> to vector<8x1xf32>
    %cst_45 = arith.constant 3.200000e+01 : f32
    %125 = vector.broadcast %cst_45 : f32 to vector<8x1xf32>
    %126 = arith.divf %124, %125 : vector<8x1xf32>
    %127 = vector.broadcast %117 : vector<8x1xf32> to vector<8x32xf32>
    %128 = arith.subf %113, %127 : vector<8x32xf32>
    %cst_46 = arith.constant 9.99999974E-6 : f32
    %129 = vector.broadcast %cst_46 : f32 to vector<8x1xf32>
    %130 = arith.addf %126, %129 : vector<8x1xf32>
    %131 = math.rsqrt %130 : vector<8x1xf32>
    %132 = vector.broadcast %131 : vector<8x1xf32> to vector<8x32xf32>
    %133 = arith.mulf %128, %132 : vector<8x32xf32>
    %c0_47 = arith.constant 0 : index
    %c0_48 = arith.constant 0 : index
    %c0_49 = arith.constant 0 : index
    %134 = vector.load %arg7[%c0_47, %c0_48, %c0_49] : memref<1x1x32xf32, #tpu.memory_space<vmem>>, vector<1x1x32xf32>
    %135 = vector.shape_cast %134 : vector<1x1x32xf32> to vector<1x32xf32>
    %136 = vector.broadcast %135 : vector<1x32xf32> to vector<8x32xf32>
    %137 = arith.mulf %133, %136 : vector<8x32xf32>
    %c0_50 = arith.constant 0 : index
    %c0_51 = arith.constant 0 : index
    %c0_52 = arith.constant 0 : index
    %138 = vector.load %arg8[%c0_50, %c0_51, %c0_52] : memref<1x1x32xf32, #tpu.memory_space<vmem>>, vector<1x1x32xf32>
    %139 = vector.shape_cast %138 : vector<1x1x32xf32> to vector<1x32xf32>
    %140 = vector.broadcast %139 : vector<1x32xf32> to vector<8x32xf32>
    %141 = arith.addf %137, %140 : vector<8x32xf32>
    %142 = arith.truncf %141 : vector<8x32xf32> to vector<8x32xbf16>
    %c0_53 = arith.constant 0 : index
    %c0_54 = arith.constant 0 : index
    %c0_55 = arith.constant 0 : index
    %143 = vector.load %arg9[%c0_53, %c0_54, %c0_55] : memref<1x32x128xbf16, #tpu.memory_space<vmem>>, vector<1x32x128xbf16>
    %144 = vector.shape_cast %143 : vector<1x32x128xbf16> to vector<32x128xbf16>
    %cst_56 = arith.constant dense<0.000000e+00> : vector<8x128xf32>
    %145 = tpu.matmul %142, %144, %cst_56 {dimension_numbers = #tpu.dot_dimension_numbers<[1], [0], [0], [1], [0, 0, 1, 1], [], []>} : vector<8x32xbf16>, vector<32x128xbf16>, vector<8x128xf32> -> vector<8x128xf32>
    %c0_57 = arith.constant 0 : index
    %c0_58 = arith.constant 0 : index
    %c0_59 = arith.constant 0 : index
    %146 = vector.load %arg10[%c0_57, %c0_58, %c0_59] : memref<1x1x128xf32, #tpu.memory_space<vmem>>, vector<1x1x128xf32>
    %147 = vector.shape_cast %146 : vector<1x1x128xf32> to vector<1x128xf32>
    %148 = vector.broadcast %147 : vector<1x128xf32> to vector<8x128xf32>
    %149 = arith.addf %145, %148 : vector<8x128xf32>
    %cst_60 = arith.constant 0.000000e+00 : f32
    %150 = vector.broadcast %cst_60 : f32 to vector<8x128xf32>
    %151 = arith.maximumf %149, %150 : vector<8x128xf32>
    %152 = arith.truncf %151 : vector<8x128xf32> to vector<8x128xbf16>
    %c0_61 = arith.constant 0 : index
    %c0_62 = arith.constant 0 : index
    %c0_63 = arith.constant 0 : index
    %153 = vector.load %arg11[%c0_61, %c0_62, %c0_63] : memref<1x128x32xbf16, #tpu.memory_space<vmem>>, vector<1x128x32xbf16>
    %154 = vector.shape_cast %153 : vector<1x128x32xbf16> to vector<128x32xbf16>
    %cst_64 = arith.constant dense<0.000000e+00> : vector<8x32xf32>
    %155 = tpu.matmul %152, %154, %cst_64 {dimension_numbers = #tpu.dot_dimension_numbers<[1], [0], [0], [1], [0, 0, 1, 1], [], []>} : vector<8x128xbf16>, vector<128x32xbf16>, vector<8x32xf32> -> vector<8x32xf32>
    %c0_65 = arith.constant 0 : index
    %c0_66 = arith.constant 0 : index
    %c0_67 = arith.constant 0 : index
    %156 = vector.load %arg12[%c0_65, %c0_66, %c0_67] : memref<1x1x32xf32, #tpu.memory_space<vmem>>, vector<1x1x32xf32>
    %157 = vector.shape_cast %156 : vector<1x1x32xf32> to vector<1x32xf32>
    %158 = vector.broadcast %157 : vector<1x32xf32> to vector<8x32xf32>
    %159 = arith.addf %155, %158 : vector<8x32xf32>
    %160 = arith.addf %141, %159 : vector<8x32xf32>
    %cst_68 = arith.constant dense<0.000000e+00> : vector<8xf32>
    %161 = vector.multi_reduction <add>, %160, %cst_68 [1] : vector<8x32xf32> to vector<8xf32>
    %162 = vector.shape_cast %161 : vector<8xf32> to vector<8x1xf32>
    %cst_69 = arith.constant 3.200000e+01 : f32
    %163 = vector.broadcast %cst_69 : f32 to vector<8x1xf32>
    %164 = arith.divf %162, %163 : vector<8x1xf32>
    %165 = vector.broadcast %164 : vector<8x1xf32> to vector<8x32xf32>
    %166 = arith.subf %160, %165 : vector<8x32xf32>
    %167 = vector.broadcast %164 : vector<8x1xf32> to vector<8x32xf32>
    %168 = arith.subf %160, %167 : vector<8x32xf32>
    %169 = arith.mulf %166, %168 : vector<8x32xf32>
    %cst_70 = arith.constant dense<0.000000e+00> : vector<8xf32>
    %170 = vector.multi_reduction <add>, %169, %cst_70 [1] : vector<8x32xf32> to vector<8xf32>
    %171 = vector.shape_cast %170 : vector<8xf32> to vector<8x1xf32>
    %cst_71 = arith.constant 3.200000e+01 : f32
    %172 = vector.broadcast %cst_71 : f32 to vector<8x1xf32>
    %173 = arith.divf %171, %172 : vector<8x1xf32>
    %174 = vector.broadcast %164 : vector<8x1xf32> to vector<8x32xf32>
    %175 = arith.subf %160, %174 : vector<8x32xf32>
    %cst_72 = arith.constant 9.99999974E-6 : f32
    %176 = vector.broadcast %cst_72 : f32 to vector<8x1xf32>
    %177 = arith.addf %173, %176 : vector<8x1xf32>
    %178 = math.rsqrt %177 : vector<8x1xf32>
    %179 = vector.broadcast %178 : vector<8x1xf32> to vector<8x32xf32>
    %180 = arith.mulf %175, %179 : vector<8x32xf32>
    %c0_73 = arith.constant 0 : index
    %c0_74 = arith.constant 0 : index
    %c0_75 = arith.constant 0 : index
    %181 = vector.load %arg13[%c0_73, %c0_74, %c0_75] : memref<1x1x32xf32, #tpu.memory_space<vmem>>, vector<1x1x32xf32>
    %182 = vector.shape_cast %181 : vector<1x1x32xf32> to vector<1x32xf32>
    %183 = vector.broadcast %182 : vector<1x32xf32> to vector<8x32xf32>
    %184 = arith.mulf %180, %183 : vector<8x32xf32>
    %c0_76 = arith.constant 0 : index
    %c0_77 = arith.constant 0 : index
    %c0_78 = arith.constant 0 : index
    %185 = vector.load %arg14[%c0_76, %c0_77, %c0_78] : memref<1x1x32xf32, #tpu.memory_space<vmem>>, vector<1x1x32xf32>
    %186 = vector.shape_cast %185 : vector<1x1x32xf32> to vector<1x32xf32>
    %187 = vector.broadcast %186 : vector<1x32xf32> to vector<8x32xf32>
    %188 = arith.addf %184, %187 : vector<8x32xf32>
    %c0_79 = arith.constant 0 : index
    %c0_80 = arith.constant 0 : index
    %c0_81 = arith.constant 0 : index
    %189 = vector.load %arg15[%c0_79, %c0_80, %c0_81] : memref<1x8x32xf32, #tpu.memory_space<vmem>>, vector<1x8x32xf32>
    %190 = vector.shape_cast %189 : vector<1x8x32xf32> to vector<8x32xf32>
    %191 = vector.shape_cast %188 : vector<8x32xf32> to vector<1x8x32xf32>
    tpu.vector_store %arg15[%c0_79, %c0_80, %c0_81], %191 {strides = array<i32>} : memref<1x8x32xf32, #tpu.memory_space<vmem>>, vector<1x8x32xf32>,
    return
  }
  func.func @transform_0(%arg0: i32, %arg1: i32) -> (i32, i32, i32) {
    %c0_i32 = arith.constant 0 : i32
    %c0_i32_0 = arith.constant 0 : i32
    %c0_i32_1 = arith.constant 0 : i32
    return %arg0, %c0_i32, %c0_i32_0 : i32, i32, i32
  }
  func.func @transform_1(%arg0: i32, %arg1: i32) -> (i32, i32, i32) {
    %c0_i32 = arith.constant 0 : i32
    %c0_i32_0 = arith.constant 0 : i32
    %c0_i32_1 = arith.constant 0 : i32
    return %arg0, %c0_i32, %c0_i32_0 : i32, i32, i32
  }
  func.func @transform_2(%arg0: i32, %arg1: i32) -> (i32, i32, i32) {
    %c0_i32 = arith.constant 0 : i32
    %c0_i32_0 = arith.constant 0 : i32
    %c0_i32_1 = arith.constant 0 : i32
    return %arg1, %c0_i32, %c0_i32_0 : i32, i32, i32
  }
  func.func @transform_3(%arg0: i32, %arg1: i32) -> (i32, i32, i32) {
    %c0_i32 = arith.constant 0 : i32
    %c0_i32_0 = arith.constant 0 : i32
    %c0_i32_1 = arith.constant 0 : i32
    return %arg1, %c0_i32, %c0_i32_0 : i32, i32, i32
  }
  func.func @transform_4(%arg0: i32, %arg1: i32) -> (i32, i32, i32) {
    %c0_i32 = arith.constant 0 : i32
    %c0_i32_0 = arith.constant 0 : i32
    %c0_i32_1 = arith.constant 0 : i32
    return %arg1, %c0_i32, %c0_i32_0 : i32, i32, i32
  }
  func.func @transform_5(%arg0: i32, %arg1: i32) -> (i32, i32, i32) {
    %c0_i32 = arith.constant 0 : i32
    %c0_i32_0 = arith.constant 0 : i32
    %c0_i32_1 = arith.constant 0 : i32
    return %arg1, %c0_i32, %c0_i32_0 : i32, i32, i32
  }
  func.func @transform_6(%arg0: i32, %arg1: i32) -> (i32, i32, i32) {
    %c0_i32 = arith.constant 0 : i32
    %c0_i32_0 = arith.constant 0 : i32
    %c0_i32_1 = arith.constant 0 : i32
    return %arg1, %c0_i32, %c0_i32_0 : i32, i32, i32
  }
  func.func @transform_7(%arg0: i32, %arg1: i32) -> (i32, i32, i32) {
    %c0_i32 = arith.constant 0 : i32
    %c0_i32_0 = arith.constant 0 : i32
    %c0_i32_1 = arith.constant 0 : i32
    return %arg1, %c0_i32, %c0_i32_0 : i32, i32, i32
  }
  func.func @transform_8(%arg0: i32, %arg1: i32) -> (i32, i32, i32) {
    %c0_i32 = arith.constant 0 : i32
    %c0_i32_0 = arith.constant 0 : i32
    %c0_i32_1 = arith.constant 0 : i32
    return %arg1, %c0_i32, %c0_i32_0 : i32, i32, i32
  }
  func.func @transform_9(%arg0: i32, %arg1: i32) -> (i32, i32, i32) {
    %c0_i32 = arith.constant 0 : i32
    %c0_i32_0 = arith.constant 0 : i32
    %c0_i32_1 = arith.constant 0 : i32
    return %arg1, %c0_i32, %c0_i32_0 : i32, i32, i32
  }
  func.func @transform_10(%arg0: i32, %arg1: i32) -> (i32, i32, i32) {
    %c0_i32 = arith.constant 0 : i32
    %c0_i32_0 = arith.constant 0 : i32
    %c0_i32_1 = arith.constant 0 : i32
    return %arg1, %c0_i32, %c0_i32_0 : i32, i32, i32
  }
  func.func @transform_11(%arg0: i32, %arg1: i32) -> (i32, i32, i32) {
    %c0_i32 = arith.constant 0 : i32
    %c0_i32_0 = arith.constant 0 : i32
    %c0_i32_1 = arith.constant 0 : i32
    return %arg1, %c0_i32, %c0_i32_0 : i32, i32, i32
  }
  func.func @transform_12(%arg0: i32, %arg1: i32) -> (i32, i32, i32) {
    %c0_i32 = arith.constant 0 : i32
    %c0_i32_0 = arith.constant 0 : i32
    %c0_i32_1 = arith.constant 0 : i32
    return %arg1, %c0_i32, %c0_i32_0 : i32, i32, i32
  }
  func.func @transform_13(%arg0: i32, %arg1: i32) -> (i32, i32, i32) {
    %c0_i32 = arith.constant 0 : i32
    %c0_i32_0 = arith.constant 0 : i32
    %c0_i32_1 = arith.constant 0 : i32
    return %arg0, %c0_i32, %c0_i32_0 : i32, i32, i32
  }
}

</mosaic_0001>

<llo_original>
// kernel: tpu_custom_call.1
$region0: #{tpu_custom_call.1}
  #allocation0 [shape = 'u32[]', space=smem, size = 0x4, offset = 0x4, fixed_abs, tag = 'smem constant byte address 0x4 - core index']
  #allocation1 [shape = 'u32[144,128]{1,0:T(1,128)}', space=vmem, size = 0x12000, scoped, tag = 'internal scratch']
  #allocation2 [shape = 'f32[8,32]{1,0:T(8,128)}', space=vmem, size = 0x1000, scoped, tag = 'scratch operand']
  %s0 = inlined_call_operand.vmem [shape: f32[2,8,32], index: 0, kind: input, shape index: {}]
  %s1 = inlined_call_operand.vmem [shape: f32[2,1,8], index: 1, kind: input, shape index: {}]
  %s2 = inlined_call_operand.vmem [shape: bf16[2,32,96], index: 2, kind: input, shape index: {}]
  %s3 = inlined_call_operand.vmem [shape: bf16[2,32,32], index: 3, kind: input, shape index: {}]
  %s4 = inlined_call_operand.vmem [shape: f32[2,1,32], index: 4, kind: input, shape index: {}]
  %s5 = inlined_call_operand.vmem [shape: f32[2,1,32], index: 5, kind: input, shape index: {}]
  %s6 = inlined_call_operand.vmem [shape: f32[2,1,32], index: 6, kind: input, shape index: {}]
  %s7 = inlined_call_operand.vmem [shape: bf16[2,32,128], index: 7, kind: input, shape index: {}]
  %s8 = inlined_call_operand.vmem [shape: f32[2,1,128], index: 8, kind: input, shape index: {}]
  %s9 = inlined_call_operand.vmem [shape: bf16[2,128,32], index: 9, kind: input, shape index: {}]
  %s10 = inlined_call_operand.vmem [shape: f32[2,1,32], index: 10, kind: input, shape index: {}]
  %s11 = inlined_call_operand.vmem [shape: f32[2,1,32], index: 11, kind: input, shape index: {}]
  %s12 = inlined_call_operand.vmem [shape: f32[2,1,32], index: 12, kind: input, shape index: {}]
  %s13 = inlined_call_operand.hbm [shape: f32[2,8,32], index: 13, kind: output, shape index: {}]
  %s14 = sld [smem:[#allocation0]]
  $region85: #{tpu_custom_call.1} parent=0
    _
  %s16 = ssub.s32 1, %s14
  %s17 = scalar_select 0, %s16, %s14
  $region1: #{tpu_custom_call.1} parent=0
    #allocation3 [shape = 'u8[8192]{0}', space=vmem, size = 0x2000, scoped, tag = 'output window, operand 0']
    #allocation4 [shape = 's32[2]{0}', space=sflag, size = 0x8, scoped, tag = 'scoped memory for tpu_custom_call.1']
    %18 = vsyncpa [#allocation4], 0
    %s19 = scalar_lea.sflag [#allocation4], 1
    %20 = vsyncpa %s19, 0
    loop: start=0, step=1, limit=6
    $region2: #{tpu_custom_call.1} parent=1 // loop_pre_header
      _
    $region3: #{tpu_custom_call.1} parent=1 // loop_header
      %s22 = sphi 0, %s26
      %p23 = scmp.ge.s32.totalorder %s22, 6
      %s29 = sphi 0, %s41
      %s30 = sphi 0, %s37
      %s31 = sphi 0, %s29
      %s32 = sphi 0, %s30
      %s33 = sphi 0, %s31
      %s34 = sphi 0, %s32
      %s44 = sphi 0, %s46
      %s47 = sphi 0, %s44
      %s48 = sphi 0, %s47
      %s64 = sphi 0, %s48
      %s70 = sphi 0, %s72
      %s73 = sphi 0, %s70
      %s74 = sphi 0, %s73
      %s90 = sphi 0, %s74
      %s96 = sphi 0, %s98
      %s99 = sphi 0, %s96
      %s100 = sphi 0, %s99
      %s116 = sphi 0, %s100
      %s122 = sphi 0, %s124
      %s125 = sphi 0, %s122
      %s126 = sphi 0, %s125
      %s142 = sphi 0, %s126
      %s148 = sphi 0, %s150
      %s151 = sphi 0, %s148
      %s152 = sphi 0, %s151
      %s168 = sphi 0, %s152
      %s174 = sphi 0, %s176
      %s177 = sphi 0, %s174
      %s178 = sphi 0, %s177
      %s194 = sphi 0, %s178
      %s200 = sphi 0, %s202
      %s203 = sphi 0, %s200
      %s204 = sphi 0, %s203
      %s220 = sphi 0, %s204
      %s226 = sphi 0, %s228
      %s229 = sphi 0, %s226
      %s230 = sphi 0, %s229
      %s246 = sphi 0, %s230
      %s252 = sphi 0, %s254
      %s255 = sphi 0, %s252
      %s256 = sphi 0, %s255
      %s272 = sphi 0, %s256
      %s278 = sphi 0, %s280
      %s281 = sphi 0, %s278
      %s282 = sphi 0, %s281
      %s298 = sphi 0, %s282
      %s304 = sphi 0, %s306
      %s307 = sphi 0, %s304
      %s308 = sphi 0, %s307
      %s324 = sphi 0, %s308
      %s330 = sphi 0, %s332
      %s333 = sphi 0, %s330
      %s334 = sphi 0, %s333
      %s350 = sphi 0, %s334
      %s356 = sphi 0, %s358
      %s359 = sphi 0, %s356
      %s360 = sphi 0, %s359
      %s376 = sphi 0, %s360
      %s382 = sphi 0, %s384
      %s385 = sphi 0, %s382
      %s386 = sphi 0, %s385
      %s402 = sphi 0, %s386
    $region4: #{tpu_custom_call.1} parent=1 // loop_header_branch
      %25 = sbr.rel (%p23) target = $region8
    $region5: #{tpu_custom_call.1} parent=1 // loop_body
      %s27 = ssub.s32 %s22, 1
      %s28 = ssub.s32 %s22, 2
      %s35 = sadd.s32 1, %s30
      %p36 = scmp.ge.s32.totalorder %s35, 2
      %s37 = scalar_select %p36, 0, %s35
      %s38 = sadd.s32 1, %s29
      %s39 = scalar_select %p36, %s38, %s29
      %p40 = scmp.ge.s32.totalorder %s39, 2
      %s41 = scalar_select %p40, 0, %s39
      %s42 = ssub.s32 %s29, %s41
      %p43 = scmp.eq.s32.totalorder %s42, 0
      %s45 = sadd.s32 %s44, 1
      %s46 = scalar_select %p43, %s44, %s45
      %p49 = pneg %p43
      %p50 = scmp.eq.s32.totalorder %s22, 3
      %p51 = por %p49, %p50
      %p52 = scmp.ne.s32.totalorder %s44, %s47
      %p53 = scmp.eq.s32.totalorder %s22, 0
      %p54 = por %p52, %p53
      %p55 = scmp.ne.s32.totalorder %s44, %s47
      %p56 = scmp.eq.s32.totalorder %s27, 3
      %p57 = por %p55, %p56
      %p58 = scmp.ne.s32.totalorder %s47, %s48
      %p59 = scmp.eq.s32.totalorder %s27, 0
      %p60 = por %p58, %p59
      %p61 = scmp.ne.s32.totalorder %s47, %s48
      %p62 = scmp.eq.s32.totalorder %s28, 3
      %p63 = por %p61, %p62
      %p65 = scmp.ne.s32.totalorder %s48, %s64
      %p66 = scmp.eq.s32.totalorder %s28, 0
      %p67 = por %p65, %p66
      %s68 = ssub.s32 %s29, %s41
      %p69 = scmp.eq.s32.totalorder %s68, 0
      %s71 = sadd.s32 %s70, 1
      %s72 = scalar_select %p69, %s70, %s71
      %p75 = pneg %p69
      %p76 = scmp.eq.s32.totalorder %s22, 3
      %p77 = por %p75, %p76
      %p78 = scmp.ne.s32.totalorder %s70, %s73
      %p79 = scmp.eq.s32.totalorder %s22, 0
      %p80 = por %p78, %p79
      %p81 = scmp.ne.s32.totalorder %s70, %s73
      %p82 = scmp.eq.s32.totalorder %s27, 3
      %p83 = por %p81, %p82
      %p84 = scmp.ne.s32.totalorder %s73, %s74
      %p85 = scmp.eq.s32.totalorder %s27, 0
      %p86 = por %p84, %p85
      %p87 = scmp.ne.s32.totalorder %s73, %s74
      %p88 = scmp.eq.s32.totalorder %s28, 3
      %p89 = por %p87, %p88
      %p91 = scmp.ne.s32.totalorder %s74, %s90
      %p92 = scmp.eq.s32.totalorder %s28, 0
      %p93 = por %p91, %p92
      %s94 = ssub.s32 %s30, %s37
      %p95 = scmp.eq.s32.totalorder %s94, 0
      %s97 = sadd.s32 %s96, 1
      %s98 = scalar_select %p95, %s96, %s97
      %p101 = pneg %p95
      %p102 = scmp.eq.s32.totalorder %s22, 3
      %p103 = por %p101, %p102
      %p104 = scmp.ne.s32.totalorder %s96, %s99
      %p105 = scmp.eq.s32.totalorder %s22, 0
      %p106 = por %p104, %p105
      %p107 = scmp.ne.s32.totalorder %s96, %s99
      %p108 = scmp.eq.s32.totalorder %s27, 3
      %p109 = por %p107, %p108
      %p110 = scmp.ne.s32.totalorder %s99, %s100
      %p111 = scmp.eq.s32.totalorder %s27, 0
      %p112 = por %p110, %p111
      %p113 = scmp.ne.s32.totalorder %s99, %s100
      %p114 = scmp.eq.s32.totalorder %s28, 3
      %p115 = por %p113, %p114
      %p117 = scmp.ne.s32.totalorder %s100, %s116
      %p118 = scmp.eq.s32.totalorder %s28, 0
      %p119 = por %p117, %p118
      %s120 = ssub.s32 %s30, %s37
      %p121 = scmp.eq.s32.totalorder %s120, 0
      %s123 = sadd.s32 %s122, 1
      %s124 = scalar_select %p121, %s122, %s123
      %p127 = pneg %p121
      %p128 = scmp.eq.s32.totalorder %s22, 3
      %p129 = por %p127, %p128
      %p130 = scmp.ne.s32.totalorder %s122, %s125
      %p131 = scmp.eq.s32.totalorder %s22, 0
      %p132 = por %p130, %p131
      %p133 = scmp.ne.s32.totalorder %s122, %s125
      %p134 = scmp.eq.s32.totalorder %s27, 3
      %p135 = por %p133, %p134
      %p136 = scmp.ne.s32.totalorder %s125, %s126
      %p137 = scmp.eq.s32.totalorder %s27, 0
      %p138 = por %p136, %p137
      %p139 = scmp.ne.s32.totalorder %s125, %s126
      %p140 = scmp.eq.s32.totalorder %s28, 3
      %p141 = por %p139, %p140
      %p143 = scmp.ne.s32.totalorder %s126, %s142
      %p144 = scmp.eq.s32.totalorder %s28, 0
      %p145 = por %p143, %p144
      %s146 = ssub.s32 %s30, %s37
      %p147 = scmp.eq.s32.totalorder %s146, 0
      %s149 = sadd.s32 %s148, 1
      %s150 = scalar_select %p147, %s148, %s149
      %p153 = pneg %p147
      %p154 = scmp.eq.s32.totalorder %s22, 3
      %p155 = por %p153, %p154
      %p156 = scmp.ne.s32.totalorder %s148, %s151
      %p157 = scmp.eq.s32.totalorder %s22, 0
      %p158 = por %p156, %p157
      %p159 = scmp.ne.s32.totalorder %s148, %s151
      %p160 = scmp.eq.s32.totalorder %s27, 3
      %p161 = por %p159, %p160
      %p162 = scmp.ne.s32.totalorder %s151, %s152
      %p163 = scmp.eq.s32.totalorder %s27, 0
      %p164 = por %p162, %p163
      %p165 = scmp.ne.s32.totalorder %s151, %s152
      %p166 = scmp.eq.s32.totalorder %s28, 3
      %p167 = por %p165, %p166
      %p169 = scmp.ne.s32.totalorder %s152, %s168
      %p170 = scmp.eq.s32.totalorder %s28, 0
      %p171 = por %p169, %p170
      %s172 = ssub.s32 %s30, %s37
      %p173 = scmp.eq.s32.totalorder %s172, 0
      %s175 = sadd.s32 %s174, 1
      %s176 = scalar_select %p173, %s174, %s175
      %p179 = pneg %p173
      %p180 = scmp.eq.s32.totalorder %s22, 3
      %p181 = por %p179, %p180
      %p182 = scmp.ne.s32.totalorder %s174, %s177
      %p183 = scmp.eq.s32.totalorder %s22, 0
      %p184 = por %p182, %p183
      %p185 = scmp.ne.s32.totalorder %s174, %s177
      %p186 = scmp.eq.s32.totalorder %s27, 3
      %p187 = por %p185, %p186
      %p188 = scmp.ne.s32.totalorder %s177, %s178
      %p189 = scmp.eq.s32.totalorder %s27, 0
      %p190 = por %p188, %p189
      %p191 = scmp.ne.s32.totalorder %s177, %s178
      %p192 = scmp.eq.s32.totalorder %s28, 3
      %p193 = por %p191, %p192
      %p195 = scmp.ne.s32.totalorder %s178, %s194
      %p196 = scmp.eq.s32.totalorder %s28, 0
      %p197 = por %p195, %p196
      %s198 = ssub.s32 %s30, %s37
      %p199 = scmp.eq.s32.totalorder %s198, 0
      %s201 = sadd.s32 %s200, 1
      %s202 = scalar_select %p199, %s200, %s201
      %p205 = pneg %p199
      %p206 = scmp.eq.s32.totalorder %s22, 3
      %p207 = por %p205, %p206
      %p208 = scmp.ne.s32.totalorder %s200, %s203
      %p209 = scmp.eq.s32.totalorder %s22, 0
      %p210 = por %p208, %p209
      %p211 = scmp.ne.s32.totalorder %s200, %s203
      %p212 = scmp.eq.s32.totalorder %s27, 3
      %p213 = por %p211, %p212
      %p214 = scmp.ne.s32.totalorder %s203, %s204
      %p215 = scmp.eq.s32.totalorder %s27, 0
      %p216 = por %p214, %p215
      %p217 = scmp.ne.s32.totalorder %s203, %s204
      %p218 = scmp.eq.s32.totalorder %s28, 3
      %p219 = por %p217, %p218
      %p221 = scmp.ne.s32.totalorder %s204, %s220
      %p222 = scmp.eq.s32.totalorder %s28, 0
      %p223 = por %p221, %p222
      %s224 = ssub.s32 %s30, %s37
      %p225 = scmp.eq.s32.totalorder %s224, 0
      %s227 = sadd.s32 %s226, 1
      %s228 = scalar_select %p225, %s226, %s227
      %p231 = pneg %p225
      %p232 = scmp.eq.s32.totalorder %s22, 3
      %p233 = por %p231, %p232
      %p234 = scmp.ne.s32.totalorder %s226, %s229
      %p235 = scmp.eq.s32.totalorder %s22, 0
      %p236 = por %p234, %p235
      %p237 = scmp.ne.s32.totalorder %s226, %s229
      %p238 = scmp.eq.s32.totalorder %s27, 3
      %p239 = por %p237, %p238
      %p240 = scmp.ne.s32.totalorder %s229, %s230
      %p241 = scmp.eq.s32.totalorder %s27, 0
      %p242 = por %p240, %p241
      %p243 = scmp.ne.s32.totalorder %s229, %s230
      %p244 = scmp.eq.s32.totalorder %s28, 3
      %p245 = por %p243, %p244
      %p247 = scmp.ne.s32.totalorder %s230, %s246
      %p248 = scmp.eq.s32.totalorder %s28, 0
      %p249 = por %p247, %p248
      %s250 = ssub.s32 %s30, %s37
      %p251 = scmp.eq.s32.totalorder %s250, 0
      %s253 = sadd.s32 %s252, 1
      %s254 = scalar_select %p251, %s252, %s253
      %p257 = pneg %p251
      %p258 = scmp.eq.s32.totalorder %s22, 3
      %p259 = por %p257, %p258
      %p260 = scmp.ne.s32.totalorder %s252, %s255
      %p261 = scmp.eq.s32.totalorder %s22, 0
      %p262 = por %p260, %p261
      %p263 = scmp.ne.s32.totalorder %s252, %s255
      %p264 = scmp.eq.s32.totalorder %s27, 3
      %p265 = por %p263, %p264
      %p266 = scmp.ne.s32.totalorder %s255, %s256
      %p267 = scmp.eq.s32.totalorder %s27, 0
      %p268 = por %p266, %p267
      %p269 = scmp.ne.s32.totalorder %s255, %s256
      %p270 = scmp.eq.s32.totalorder %s28, 3
      %p271 = por %p269, %p270
      %p273 = scmp.ne.s32.totalorder %s256, %s272
      %p274 = scmp.eq.s32.totalorder %s28, 0
      %p275 = por %p273, %p274
      %s276 = ssub.s32 %s30, %s37
      %p277 = scmp.eq.s32.totalorder %s276, 0
      %s279 = sadd.s32 %s278, 1
      %s280 = scalar_select %p277, %s278, %s279
      %p283 = pneg %p277
      %p284 = scmp.eq.s32.totalorder %s22, 3
      %p285 = por %p283, %p284
      %p286 = scmp.ne.s32.totalorder %s278, %s281
      %p287 = scmp.eq.s32.totalorder %s22, 0
      %p288 = por %p286, %p287
      %p289 = scmp.ne.s32.totalorder %s278, %s281
      %p290 = scmp.eq.s32.totalorder %s27, 3
      %p291 = por %p289, %p290
      %p292 = scmp.ne.s32.totalorder %s281, %s282
      %p293 = scmp.eq.s32.totalorder %s27, 0
      %p294 = por %p292, %p293
      %p295 = scmp.ne.s32.totalorder %s281, %s282
      %p296 = scmp.eq.s32.totalorder %s28, 3
      %p297 = por %p295, %p296
      %p299 = scmp.ne.s32.totalorder %s282, %s298
      %p300 = scmp.eq.s32.totalorder %s28, 0
      %p301 = por %p299, %p300
      %s302 = ssub.s32 %s30, %s37
      %p303 = scmp.eq.s32.totalorder %s302, 0
      %s305 = sadd.s32 %s304, 1
      %s306 = scalar_select %p303, %s304, %s305
      %p309 = pneg %p303
      %p310 = scmp.eq.s32.totalorder %s22, 3
      %p311 = por %p309, %p310
      %p312 = scmp.ne.s32.totalorder %s304, %s307
      %p313 = scmp.eq.s32.totalorder %s22, 0
      %p314 = por %p312, %p313
      %p315 = scmp.ne.s32.totalorder %s304, %s307
      %p316 = scmp.eq.s32.totalorder %s27, 3
      %p317 = por %p315, %p316
      %p318 = scmp.ne.s32.totalorder %s307, %s308
      %p319 = scmp.eq.s32.totalorder %s27, 0
      %p320 = por %p318, %p319
      %p321 = scmp.ne.s32.totalorder %s307, %s308
      %p322 = scmp.eq.s32.totalorder %s28, 3
      %p323 = por %p321, %p322
      %p325 = scmp.ne.s32.totalorder %s308, %s324
      %p326 = scmp.eq.s32.totalorder %s28, 0
      %p327 = por %p325, %p326
      %s328 = ssub.s32 %s30, %s37
      %p329 = scmp.eq.s32.totalorder %s328, 0
      %s331 = sadd.s32 %s330, 1
      %s332 = scalar_select %p329, %s330, %s331
      %p335 = pneg %p329
      %p336 = scmp.eq.s32.totalorder %s22, 3
      %p337 = por %p335, %p336
      %p338 = scmp.ne.s32.totalorder %s330, %s333
      %p339 = scmp.eq.s32.totalorder %s22, 0
      %p340 = por %p338, %p339
      %p341 = scmp.ne.s32.totalorder %s330, %s333
      %p342 = scmp.eq.s32.totalorder %s27, 3
      %p343 = por %p341, %p342
      %p344 = scmp.ne.s32.totalorder %s333, %s334
      %p345 = scmp.eq.s32.totalorder %s27, 0
      %p346 = por %p344, %p345
      %p347 = scmp.ne.s32.totalorder %s333, %s334
      %p348 = scmp.eq.s32.totalorder %s28, 3
      %p349 = por %p347, %p348
      %p351 = scmp.ne.s32.totalorder %s334, %s350
      %p352 = scmp.eq.s32.totalorder %s28, 0
      %p353 = por %p351, %p352
      %s354 = ssub.s32 %s30, %s37
      %p355 = scmp.eq.s32.totalorder %s354, 0
      %s357 = sadd.s32 %s356, 1
      %s358 = scalar_select %p355, %s356, %s357
      %p361 = pneg %p355
      %p362 = scmp.eq.s32.totalorder %s22, 3
      %p363 = por %p361, %p362
      %p364 = scmp.ne.s32.totalorder %s356, %s359
      %p365 = scmp.eq.s32.totalorder %s22, 0
      %p366 = por %p364, %p365
      %p367 = scmp.ne.s32.totalorder %s356, %s359
      %p368 = scmp.eq.s32.totalorder %s27, 3
      %p369 = por %p367, %p368
      %p370 = scmp.ne.s32.totalorder %s359, %s360
      %p371 = scmp.eq.s32.totalorder %s27, 0
      %p372 = por %p370, %p371
      %p373 = scmp.ne.s32.totalorder %s359, %s360
      %p374 = scmp.eq.s32.totalorder %s28, 3
      %p375 = por %p373, %p374
      %p377 = scmp.ne.s32.totalorder %s360, %s376
      %p378 = scmp.eq.s32.totalorder %s28, 0
      %p379 = por %p377, %p378
      %s380 = ssub.s32 %s29, %s41
      %p381 = scmp.eq.s32.totalorder %s380, 0
      %s383 = sadd.s32 %s382, 1
      %s384 = scalar_select %p381, %s382, %s383
      %p387 = pneg %p381
      %p388 = scmp.eq.s32.totalorder %s22, 3
      %p389 = por %p387, %p388
      %p390 = scmp.ne.s32.totalorder %s382, %s385
      %p391 = scmp.eq.s32.totalorder %s22, 0
      %p392 = por %p390, %p391
      %p393 = scmp.ne.s32.totalorder %s382, %s385
      %p394 = scmp.eq.s32.totalorder %s27, 3
      %p395 = por %p393, %p394
      %p396 = scmp.ne.s32.totalorder %s385, %s386
      %p397 = scmp.eq.s32.totalorder %s27, 0
      %p398 = por %p396, %p397
      %p399 = scmp.ne.s32.totalorder %s385, %s386
      %p400 = scmp.eq.s32.totalorder %s28, 3
      %p401 = por %p399, %p400
      %p403 = scmp.ne.s32.totalorder %s386, %s402
      %p404 = scmp.eq.s32.totalorder %s28, 0
      %p405 = por %p403, %p404
      %p406 = scmp.le.s32.totalorder 1, %s22
      %p407 = scmp.lt.s32.totalorder %s22, 5
      %p408 = pnand %p406, %p407
      %p409 = pneg %p408
      // Predicated region
      $region9: #{tpu_custom_call.1} parent=5 // pred_check
        _
      $region10: #{tpu_custom_call.1} parent=5 // pred_check_branch
        %411 = sbr.rel (%p408) target = $region12
      $region11: #{tpu_custom_call.1} parent=5 // pred_region
        %s412 = ssub.s32 %s22, 1
      $region12: #{tpu_custom_call.1} parent=5 // pred_fallthru
        _
      %p413 = scmp.lt.s32.totalorder %s22, 4
      // Predicated region
      $region13: #{tpu_custom_call.1} parent=5 // pred_check
        %p414 = pneg %p413
      $region14: #{tpu_custom_call.1} parent=5 // pred_check_branch
        %416 = sbr.rel (%p414) target = $region16
      $region15: #{tpu_custom_call.1} parent=5 // pred_region
        // Predicated region
        $region17: #{tpu_custom_call.1} parent=15 // pred_check
          %p417 = pneg %p54
        $region18: #{tpu_custom_call.1} parent=15 // pred_check_branch
          %419 = sbr.rel (%p417) target = $region20
        $region19: #{tpu_custom_call.1} parent=15 // pred_region
          %p420 = scmp.lt.s32.totalorder %s29, 1
          %s421 = scalar_select %p420, %s29, 1
          %s422 = smul.addr %s421, 8
          %s423 = scalar_lea.vmem %s0, %s422
        $region20: #{tpu_custom_call.1} parent=15 // pred_fallthru
          _
        // Predicated region
        $region21: #{tpu_custom_call.1} parent=15 // pred_check
          %p424 = pneg %p80
        $region22: #{tpu_custom_call.1} parent=15 // pred_check_branch
          %426 = sbr.rel (%p424) target = $region24
        $region23: #{tpu_custom_call.1} parent=15 // pred_region
          %p427 = scmp.lt.s32.totalorder %s29, 1
          %s428 = scalar_select %p427, %s29, 1
          %s429 = scalar_lea.vmem %s1, %s428
        $region24: #{tpu_custom_call.1} parent=15 // pred_fallthru
          _
        // Predicated region
        $region25: #{tpu_custom_call.1} parent=15 // pred_check
          %p430 = pneg %p106
        $region26: #{tpu_custom_call.1} parent=15 // pred_check_branch
          %432 = sbr.rel (%p430) target = $region28
        $region27: #{tpu_custom_call.1} parent=15 // pred_region
          %p433 = scmp.lt.s32.totalorder %s30, 1
          %s434 = scalar_select %p433, %s30, 1
          %s435 = smul.addr %s434, 4
          %s436 = smul.addr %s435, 4
          %s437 = scalar_lea.vmem %s2, %s436
        $region28: #{tpu_custom_call.1} parent=15 // pred_fallthru
          _
        // Predicated region
        $region29: #{tpu_custom_call.1} parent=15 // pred_check
          %p438 = pneg %p132
        $region30: #{tpu_custom_call.1} parent=15 // pred_check_branch
          %440 = sbr.rel (%p438) target = $region32
        $region31: #{tpu_custom_call.1} parent=15 // pred_region
          %p441 = scmp.lt.s32.totalorder %s30, 1
          %s442 = scalar_select %p441, %s30, 1
          %s443 = smul.addr %s442, 4
          %s444 = smul.addr %s443, 4
          %s445 = scalar_lea.vmem %s3, %s444
        $region32: #{tpu_custom_call.1} parent=15 // pred_fallthru
          _
        // Predicated region
        $region33: #{tpu_custom_call.1} parent=15 // pred_check
          %p446 = pneg %p158
        $region34: #{tpu_custom_call.1} parent=15 // pred_check_branch
          %448 = sbr.rel (%p446) target = $region36
        $region35: #{tpu_custom_call.1} parent=15 // pred_region
          %p449 = scmp.lt.s32.totalorder %s30, 1
          %s450 = scalar_select %p449, %s30, 1
          %s451 = scalar_lea.vmem %s4, %s450
        $region36: #{tpu_custom_call.1} parent=15 // pred_fallthru
          _
        // Predicated region
        $region37: #{tpu_custom_call.1} parent=15 // pred_check
          %p452 = pneg %p184
        $region38: #{tpu_custom_call.1} parent=15 // pred_check_branch
          %454 = sbr.rel (%p452) target = $region40
        $region39: #{tpu_custom_call.1} parent=15 // pred_region
          %p455 = scmp.lt.s32.totalorder %s30, 1
          %s456 = scalar_select %p455, %s30, 1
          %s457 = scalar_lea.vmem %s5, %s456
        $region40: #{tpu_custom_call.1} parent=15 // pred_fallthru
          _
        // Predicated region
        $region41: #{tpu_custom_call.1} parent=15 // pred_check
          %p458 = pneg %p210
        $region42: #{tpu_custom_call.1} parent=15 // pred_check_branch
          %460 = sbr.rel (%p458) target = $region44
        $region43: #{tpu_custom_call.1} parent=15 // pred_region
          %p461 = scmp.lt.s32.totalorder %s30, 1
          %s462 = scalar_select %p461, %s30, 1
          %s463 = scalar_lea.vmem %s6, %s462
        $region44: #{tpu_custom_call.1} parent=15 // pred_fallthru
          _
        // Predicated region
        $region45: #{tpu_custom_call.1} parent=15 // pred_check
          %p464 = pneg %p236
        $region46: #{tpu_custom_call.1} parent=15 // pred_check_branch
          %466 = sbr.rel (%p464) target = $region48
        $region47: #{tpu_custom_call.1} parent=15 // pred_region
          %p467 = scmp.lt.s32.totalorder %s30, 1
          %s468 = scalar_select %p467, %s30, 1
          %s469 = smul.addr %s468, 4
          %s470 = smul.addr %s469, 4
          %s471 = scalar_lea.vmem %s7, %s470
        $region48: #{tpu_custom_call.1} parent=15 // pred_fallthru
          _
        // Predicated region
        $region49: #{tpu_custom_call.1} parent=15 // pred_check
          %p472 = pneg %p262
        $region50: #{tpu_custom_call.1} parent=15 // pred_check_branch
          %474 = sbr.rel (%p472) target = $region52
        $region51: #{tpu_custom_call.1} parent=15 // pred_region
          %p475 = scmp.lt.s32.totalorder %s30, 1
          %s476 = scalar_select %p475, %s30, 1
          %s477 = scalar_lea.vmem %s8, %s476
        $region52: #{tpu_custom_call.1} parent=15 // pred_fallthru
          _
        // Predicated region
        $region53: #{tpu_custom_call.1} parent=15 // pred_check
          %p478 = pneg %p288
        $region54: #{tpu_custom_call.1} parent=15 // pred_check_branch
          %480 = sbr.rel (%p478) target = $region56
        $region55: #{tpu_custom_call.1} parent=15 // pred_region
          %p481 = scmp.lt.s32.totalorder %s30, 1
          %s482 = scalar_select %p481, %s30, 1
          %s483 = smul.addr %s482, 16
          %s484 = smul.addr %s483, 4
          %s485 = scalar_lea.vmem %s9, %s484
        $region56: #{tpu_custom_call.1} parent=15 // pred_fallthru
          _
        // Predicated region
        $region57: #{tpu_custom_call.1} parent=15 // pred_check
          %p486 = pneg %p314
        $region58: #{tpu_custom_call.1} parent=15 // pred_check_branch
          %488 = sbr.rel (%p486) target = $region60
        $region59: #{tpu_custom_call.1} parent=15 // pred_region
          %p489 = scmp.lt.s32.totalorder %s30, 1
          %s490 = scalar_select %p489, %s30, 1
          %s491 = scalar_lea.vmem %s10, %s490
        $region60: #{tpu_custom_call.1} parent=15 // pred_fallthru
          _
        // Predicated region
        $region61: #{tpu_custom_call.1} parent=15 // pred_check
          %p492 = pneg %p340
        $region62: #{tpu_custom_call.1} parent=15 // pred_check_branch
          %494 = sbr.rel (%p492) target = $region64
        $region63: #{tpu_custom_call.1} parent=15 // pred_region
          %p495 = scmp.lt.s32.totalorder %s30, 1
          %s496 = scalar_select %p495, %s30, 1
          %s497 = scalar_lea.vmem %s11, %s496
        $region64: #{tpu_custom_call.1} parent=15 // pred_fallthru
          _
        // Predicated region
        $region65: #{tpu_custom_call.1} parent=15 // pred_check
          %p498 = pneg %p366
        $region66: #{tpu_custom_call.1} parent=15 // pred_check_branch
          %500 = sbr.rel (%p498) target = $region68
        $region67: #{tpu_custom_call.1} parent=15 // pred_region
          %p501 = scmp.lt.s32.totalorder %s30, 1
          %s502 = scalar_select %p501, %s30, 1
          %s503 = scalar_lea.vmem %s12, %s502
        $region68: #{tpu_custom_call.1} parent=15 // pred_fallthru
          _
      $region16: #{tpu_custom_call.1} parent=5 // pred_fallthru
        _
      %p504 = scmp.le.s32.totalorder 1, %s22
      %p505 = scmp.lt.s32.totalorder %s22, 5
      %p506 = pnand %p504, %p505
      %p507 = pneg %p506
      // Predicated region
      $region69: #{tpu_custom_call.1} parent=5 // pred_check
        _
      $region70: #{tpu_custom_call.1} parent=5 // pred_check_branch
        %509 = sbr.rel (%p506) target = $region72
      $region71: #{tpu_custom_call.1} parent=5 // pred_region
        %s510 = ssub.s32 %s22, 1
        %p511 = scmp.lt.s32.totalorder %s31, 1
        %s512 = scalar_select %p511, %s31, 1
        %s513 = smul.addr %s512, 8
        %s514 = scalar_lea.vmem %s0, %s513
        %p515 = pneg %p60
        %p516 = pneg %p57
        %p517 = scmp.lt.s32.totalorder %s31, 1
        %s518 = scalar_select %p517, %s31, 1
        %s519 = scalar_lea.vmem %s1, %s518
        %p520 = pneg %p86
        %p521 = pneg %p83
        %p522 = scmp.lt.s32.totalorder %s32, 1
        %s523 = scalar_select %p522, %s32, 1
        %s524 = smul.addr %s523, 4
        %s525 = smul.addr %s524, 4
        %s526 = scalar_lea.vmem %s2, %s525
        %p527 = pneg %p112
        %p528 = pneg %p109
        %p529 = scmp.lt.s32.totalorder %s32, 1
        %s530 = scalar_select %p529, %s32, 1
        %s531 = smul.addr %s530, 4
        %s532 = smul.addr %s531, 4
        %s533 = scalar_lea.vmem %s3, %s532
        %p534 = pneg %p138
        %p535 = pneg %p135
        %p536 = scmp.lt.s32.totalorder %s32, 1
        %s537 = scalar_select %p536, %s32, 1
        %s538 = scalar_lea.vmem %s4, %s537
        %p539 = pneg %p164
        %p540 = pneg %p161
        %p541 = scmp.lt.s32.totalorder %s32, 1
        %s542 = scalar_select %p541, %s32, 1
        %s543 = scalar_lea.vmem %s5, %s542
        %p544 = pneg %p190
        %p545 = pneg %p187
        %p546 = scmp.lt.s32.totalorder %s32, 1
        %s547 = scalar_select %p546, %s32, 1
        %s548 = scalar_lea.vmem %s6, %s547
        %p549 = pneg %p216
        %p550 = pneg %p213
        %p551 = scmp.lt.s32.totalorder %s32, 1
        %s552 = scalar_select %p551, %s32, 1
        %s553 = smul.addr %s552, 4
        %s554 = smul.addr %s553, 4
        %s555 = scalar_lea.vmem %s7, %s554
        %p556 = pneg %p242
        %p557 = pneg %p239
        %p558 = scmp.lt.s32.totalorder %s32, 1
        %s559 = scalar_select %p558, %s32, 1
        %s560 = scalar_lea.vmem %s8, %s559
        %p561 = pneg %p268
        %p562 = pneg %p265
        %p563 = scmp.lt.s32.totalorder %s32, 1
        %s564 = scalar_select %p563, %s32, 1
        %s565 = smul.addr %s564, 16
        %s566 = smul.addr %s565, 4
        %s567 = scalar_lea.vmem %s9, %s566
        %p568 = pneg %p294
        %p569 = pneg %p291
        %p570 = scmp.lt.s32.totalorder %s32, 1
        %s571 = scalar_select %p570, %s32, 1
        %s572 = scalar_lea.vmem %s10, %s571
        %p573 = pneg %p320
        %p574 = pneg %p317
        %p575 = scmp.lt.s32.totalorder %s32, 1
        %s576 = scalar_select %p575, %s32, 1
        %s577 = scalar_lea.vmem %s11, %s576
        %p578 = pneg %p346
        %p579 = pneg %p343
        %p580 = scmp.lt.s32.totalorder %s32, 1
        %s581 = scalar_select %p580, %s32, 1
        %s582 = scalar_lea.vmem %s12, %s581
        %p583 = pneg %p372
        %p584 = pneg %p369
        %p585 = pneg %p398
        %p586 = pneg %p395
        %s587 = sand.u32 %s385, 1
        %s588 = scalar_lea.sflag [#allocation4], %s587
        %s589 = sand.u32 %s385, 1
        %s590 = smul.addr %s589, 8
        %s591 = scalar_lea.vmem [#allocation3], %s590
        %p592 = scmp.lt.s32.totalorder %s31, 1
        %s593 = scalar_select %p592, %s31, 1
        %s594 = smul.addr %s593, 8
        %s595 = scalar_lea.vmem %s0, %s594
        %p596 = scmp.lt.s32.totalorder %s31, 1
        %s597 = scalar_select %p596, %s31, 1
        %s598 = scalar_lea.vmem %s1, %s597
        %p599 = scmp.lt.s32.totalorder %s32, 1
        %s600 = scalar_select %p599, %s32, 1
        %s601 = smul.addr %s600, 4
        %s602 = smul.addr %s601, 4
        %s603 = scalar_lea.vmem %s2, %s602
        %p604 = scmp.lt.s32.totalorder %s32, 1
        %s605 = scalar_select %p604, %s32, 1
        %s606 = smul.addr %s605, 4
        %s607 = smul.addr %s606, 4
        %s608 = scalar_lea.vmem %s3, %s607
        %p609 = scmp.lt.s32.totalorder %s32, 1
        %s610 = scalar_select %p609, %s32, 1
        %s611 = scalar_lea.vmem %s4, %s610
        %p612 = scmp.lt.s32.totalorder %s32, 1
        %s613 = scalar_select %p612, %s32, 1
        %s614 = scalar_lea.vmem %s5, %s613
        %p615 = scmp.lt.s32.totalorder %s32, 1
        %s616 = scalar_select %p615, %s32, 1
        %s617 = scalar_lea.vmem %s6, %s616
        %p618 = scmp.lt.s32.totalorder %s32, 1
        %s619 = scalar_select %p618, %s32, 1
        %s620 = smul.addr %s619, 4
        %s621 = smul.addr %s620, 4
        %s622 = scalar_lea.vmem %s7, %s621
        %p623 = scmp.lt.s32.totalorder %s32, 1
        %s624 = scalar_select %p623, %s32, 1
        %s625 = scalar_lea.vmem %s8, %s624
        %p626 = scmp.lt.s32.totalorder %s32, 1
        %s627 = scalar_select %p626, %s32, 1
        %s628 = smul.addr %s627, 16
        %s629 = smul.addr %s628, 4
        %s630 = scalar_lea.vmem %s9, %s629
        %p631 = scmp.lt.s32.totalorder %s32, 1
        %s632 = scalar_select %p631, %s32, 1
        %s633 = scalar_lea.vmem %s10, %s632
        %p634 = scmp.lt.s32.totalorder %s32, 1
        %s635 = scalar_select %p634, %s32, 1
        %s636 = scalar_lea.vmem %s11, %s635
        %p637 = scmp.lt.s32.totalorder %s32, 1
        %s638 = scalar_select %p637, %s32, 1
        %s639 = scalar_lea.vmem %s12, %s638
        %v641 = vld [vmem:[%s595] sm:$0xff]
        %v642 = vld [vmem:[%s598] sm:$0x1]
        %v643 = vpack.c.bf16 %v641, %v641
        %v644 = vld [vmem:[%s603] sm:$0xf]
        %v645 = vld [vmem:[%s603 + $0x4] sm:$0xf]
        %v646 = vld [vmem:[%s603 + $0x8] sm:$0xf]
        %v647 = vld [vmem:[%s603 + $0xc] sm:$0xf]
        %v652 = vunpack.c.l.b16 %v644
        %v653 = vunpack.c.l.b16 %v645
        %v654 = vunpack.c.l.b16 %v646
        %v655 = vunpack.c.l.b16 %v647
        %v656 = vpack.c.b16 %v653, %v652
        %v657 = vpack.c.b16 %v655, %v654
        %vm660 = vcmask 261120
        %v662 = vsel %vm660, %v643, 0
        %664 = vmatprep.subr.bf16.mxu0 0
        %665 = vmatpush1.bf16.msra.mxu0 %v656
        %666 = vmatprep.subr.bf16.mxu0 0
        %667 = vmatpush1.bf16.msra.mxu0 %v657
        %668 = vmatprep.subr.bf16.mxu0 0
        %669 = vmatpush1.bf16.msra.mxu0 0
        %670 = vmatprep.subr.bf16.mxu0 0
        %671 = vmatpush1.bf16.msra.mxu0 0
        %672 = vmatprep.subr.bf16.mxu0 0
        %673 = vmatpush1.bf16.msra.mxu0 0
        %674 = vmatprep.subr.bf16.mxu0 0
        %675 = vmatpush1.bf16.msra.mxu0 0
        %676 = vmatprep.subr.bf16.mxu0 0
        %677 = vmatpush1.bf16.msra.mxu0 0
        %678 = vmatprep.subr.bf16.mxu0 0
        %679 = vmatpush1.bf16.msra.mxu0 0
        %680 = vmatprep.subr.bf16.mxu0 0
        %681 = vmatpush1.bf16.msra.mxu0 0
        %682 = vmatprep.subr.bf16.mxu0 0
        %683 = vmatpush1.bf16.msra.mxu0 0
        %684 = vmatprep.subr.bf16.mxu0 0
        %685 = vmatpush1.bf16.msra.mxu0 0
        %686 = vmatprep.subr.bf16.mxu0 0
        %687 = vmatpush1.bf16.msra.mxu0 0
        %688 = vmatprep.subr.bf16.mxu0 0
        %689 = vmatpush1.bf16.msra.mxu0 0
        %690 = vmatprep.subr.bf16.mxu0 0
        %691 = vmatpush1.bf16.msra.mxu0 0
        %692 = vmatprep.subr.bf16.mxu0 0
        %693 = vmatpush1.bf16.msra.mxu0 0
        %694 = vmatprep.subr.bf16.mxu0 0
        %695 = vmatpush1.bf16.msra.mxu0 0
        %696 = vmatprep.mubr.bf16.mxu0 0
        %697 = vmatmul.mubr.bf16.gmra.mrb[0].mxu0 %v662
        %v698 = vpop.f32.mrb[0].mxu0
        %v699 = vadd.f32 0.0, %v698
        %v700 = vpop.f32.mrb[0].mxu0
        %v701 = vpop.f32.mrb[0].mxu0
        %v702 = vpop.f32.mrb[0].mxu0
        %703 = vdwg.mxu0
        %v704 = vpack.c.bf16 %v699, %v699
        %v706 = vlaneseq
        %v707 = vshrl.u32 %v706, 7
        %v708 = vsub.s32 0, %v707
        %v709 = vrot.slane %v642, %v708
        %712 = vrot.lane.b32.xlu0 %v704, 96
        %v713 = vpop.permute.xlu0 %712
        %vm714 = vcmask 64512
        %v716 = vsel %vm714, %v704, 0
        %v719 = vsel %vm714, %v713, 0
        %721 = vmatprep.subr.bf16.mxu0 0
        %722 = vmatpush1.bf16.xpose.msra.mxu0 %v719
        %723 = vmatprep.subr.bf16.mxu0 0
        %724 = vmatpush1.bf16.xpose.msra.mxu0 0
        %725 = vmatprep.subr.bf16.mxu0 0
        %726 = vmatpush1.bf16.xpose.msra.mxu0 0
        %727 = vmatprep.subr.bf16.mxu0 0
        %728 = vmatpush1.bf16.xpose.msra.mxu0 0
        %729 = vmatprep.subr.bf16.mxu0 0
        %730 = vmatpush1.bf16.xpose.msra.mxu0 0
        %731 = vmatprep.subr.bf16.mxu0 0
        %732 = vmatpush1.bf16.xpose.msra.mxu0 0
        %733 = vmatprep.subr.bf16.mxu0 0
        %734 = vmatpush1.bf16.xpose.msra.mxu0 0
        %735 = vmatprep.subr.bf16.mxu0 0
        %736 = vmatpush1.bf16.xpose.msra.mxu0 0
        %737 = vmatprep.subr.bf16.mxu0 0
        %738 = vmatpush1.bf16.xpose.msra.mxu0 0
        %739 = vmatprep.subr.bf16.mxu0 0
        %740 = vmatpush1.bf16.xpose.msra.mxu0 0
        %741 = vmatprep.subr.bf16.mxu0 0
        %742 = vmatpush1.bf16.xpose.msra.mxu0 0
        %743 = vmatprep.subr.bf16.mxu0 0
        %744 = vmatpush1.bf16.xpose.msra.mxu0 0
        %745 = vmatprep.subr.bf16.mxu0 0
        %746 = vmatpush1.bf16.xpose.msra.mxu0 0
        %747 = vmatprep.subr.bf16.mxu0 0
        %748 = vmatpush1.bf16.xpose.msra.mxu0 0
        %749 = vmatprep.subr.bf16.mxu0 0
        %750 = vmatpush1.bf16.xpose.msra.mxu0 0
        %751 = vmatprep.subr.bf16.mxu0 0
        %752 = vmatpush1.bf16.xpose.msra.mxu0 0
        %753 = vmatprep.mubr.bf16.mxu0 0
        %754 = vmatmul.mubr.bf16.gmra.mrb[0].mxu0 %v716
        %v755 = vpop.f32.mrb[0].mxu0
        %v756 = vadd.f32 %v709, %v755
        %v757 = vpop.f32.mrb[0].mxu0
        %v758 = vpop.f32.mrb[0].mxu0
        %v759 = vpop.f32.mrb[0].mxu0
        %760 = vdwg.mxu0
        %v761 = vmul.f32 %v756, 0.17677669
        %v762 = vsel %vm714, %v761, -inf
        %763 = vmax.xlane.f32.xlu0 %v762
        %v764 = vpop.xlane.xlu0 %763
        %v765 = vsub.f32 %v761, %v764
        %v766 = vmul.f32 %v765, 1.442695
        %v767 = vpow.pop %v766
        %v768 = vsel %vm714, %v767, 0.0
        %769 = vadd.xlane.f32.xlu0 %v768
        %v770 = vpop.xlane.xlu0 %769
        %v771 = vrcp.pop %v770
        %v772 = vmul.f32 %v767, %v771
        %v773 = vpack.c.bf16 %v772, %v772
        %774 = vrot.lane.b32.xlu0 %v704, 64
        %v775 = vpop.permute.xlu0 %774
        %v777 = vsel %vm714, %v773, 0
        %vm779 = vcmask 1043456
        %v781 = vsel %vm779, %v775, 0
        %783 = vmatprep.subr.bf16.mxu0 0
        %784 = vmatpush1.bf16.msra.mxu0 %v781
        %785 = vmatprep.subr.bf16.mxu0 0
        %786 = vmatpush1.bf16.msra.mxu0 0
        %787 = vmatprep.subr.bf16.mxu0 0
        %788 = vmatpush1.bf16.msra.mxu0 0
        %789 = vmatprep.subr.bf16.mxu0 0
        %790 = vmatpush1.bf16.msra.mxu0 0
        %791 = vmatprep.subr.bf16.mxu0 0
        %792 = vmatpush1.bf16.msra.mxu0 0
        %793 = vmatprep.subr.bf16.mxu0 0
        %794 = vmatpush1.bf16.msra.mxu0 0
        %795 = vmatprep.subr.bf16.mxu0 0
        %796 = vmatpush1.bf16.msra.mxu0 0
        %797 = vmatprep.subr.bf16.mxu0 0
        %798 = vmatpush1.bf16.msra.mxu0 0
        %799 = vmatprep.subr.bf16.mxu0 0
        %800 = vmatpush1.bf16.msra.mxu0 0
        %801 = vmatprep.subr.bf16.mxu0 0
        %802 = vmatpush1.bf16.msra.mxu0 0
        %803 = vmatprep.subr.bf16.mxu0 0
        %804 = vmatpush1.bf16.msra.mxu0 0
        %805 = vmatprep.subr.bf16.mxu0 0
        %806 = vmatpush1.bf16.msra.mxu0 0
        %807 = vmatprep.subr.bf16.mxu0 0
        %808 = vmatpush1.bf16.msra.mxu0 0
        %809 = vmatprep.subr.bf16.mxu0 0
        %810 = vmatpush1.bf16.msra.mxu0 0
        %811 = vmatprep.subr.bf16.mxu0 0
        %812 = vmatpush1.bf16.msra.mxu0 0
        %813 = vmatprep.subr.bf16.mxu0 0
        %814 = vmatpush1.bf16.msra.mxu0 0
        %815 = vmatprep.mubr.bf16.mxu0 0
        %816 = vmatmul.mubr.bf16.gmra.mrb[0].mxu0 %v777
        %v817 = vpop.f32.mrb[0].mxu0
        %v818 = vadd.f32 0.0, %v817
        %v819 = vpop.f32.mrb[0].mxu0
        %v820 = vpop.f32.mrb[0].mxu0
        %v821 = vpop.f32.mrb[0].mxu0
        %822 = vdwg.mxu0
        %823 = vst.msk [vmem:[#allocation2] sm:$0xff] %vm714, %v818
        %824 = vrot.lane.b32.xlu0 %v704, 120
        %v825 = vpop.permute.xlu0 %824
        %826 = vrot.lane.b32.xlu0 %v704, 88
        %v827 = vpop.permute.xlu0 %826
        %v829 = vsel %vm714, %v825, 0
        %v832 = vsel %vm714, %v827, 0
        %834 = vmatprep.subr.bf16.mxu0 0
        %835 = vmatpush1.bf16.xpose.msra.mxu0 %v832
        %836 = vmatprep.subr.bf16.mxu0 0
        %837 = vmatpush1.bf16.xpose.msra.mxu0 0
        %838 = vmatprep.subr.bf16.mxu0 0
        %839 = vmatpush1.bf16.xpose.msra.mxu0 0
        %840 = vmatprep.subr.bf16.mxu0 0
        %841 = vmatpush1.bf16.xpose.msra.mxu0 0
        %842 = vmatprep.subr.bf16.mxu0 0
        %843 = vmatpush1.bf16.xpose.msra.mxu0 0
        %844 = vmatprep.subr.bf16.mxu0 0
        %845 = vmatpush1.bf16.xpose.msra.mxu0 0
        %846 = vmatprep.subr.bf16.mxu0 0
        %847 = vmatpush1.bf16.xpose.msra.mxu0 0
        %848 = vmatprep.subr.bf16.mxu0 0
        %849 = vmatpush1.bf16.xpose.msra.mxu0 0
        %850 = vmatprep.subr.bf16.mxu0 0
        %851 = vmatpush1.bf16.xpose.msra.mxu0 0
        %852 = vmatprep.subr.bf16.mxu0 0
        %853 = vmatpush1.bf16.xpose.msra.mxu0 0
        %854 = vmatprep.subr.bf16.mxu0 0
        %855 = vmatpush1.bf16.xpose.msra.mxu0 0
        %856 = vmatprep.subr.bf16.mxu0 0
        %857 = vmatpush1.bf16.xpose.msra.mxu0 0
        %858 = vmatprep.subr.bf16.mxu0 0
        %859 = vmatpush1.bf16.xpose.msra.mxu0 0
        %860 = vmatprep.subr.bf16.mxu0 0
        %861 = vmatpush1.bf16.xpose.msra.mxu0 0
        %862 = vmatprep.subr.bf16.mxu0 0
        %863 = vmatpush1.bf16.xpose.msra.mxu0 0
        %864 = vmatprep.subr.bf16.mxu0 0
        %865 = vmatpush1.bf16.xpose.msra.mxu0 0
        %866 = vmatprep.mubr.bf16.mxu0 0
        %867 = vmatmul.mubr.bf16.gmra.mrb[0].mxu0 %v829
        %v868 = vpop.f32.mrb[0].mxu0
        %v869 = vadd.f32 %v709, %v868
        %v870 = vpop.f32.mrb[0].mxu0
        %v871 = vpop.f32.mrb[0].mxu0
        %v872 = vpop.f32.mrb[0].mxu0
        %873 = vdwg.mxu0
        %v874 = vmul.f32 %v869, 0.17677669
        %v875 = vsel %vm714, %v874, -inf
        %876 = vmax.xlane.f32.xlu0 %v875
        %v877 = vpop.xlane.xlu0 %876
        %v878 = vsub.f32 %v874, %v877
        %v879 = vmul.f32 %v878, 1.442695
        %v880 = vpow.pop %v879
        %v881 = vsel %vm714, %v880, 0.0
        %882 = vadd.xlane.f32.xlu0 %v881
        %v883 = vpop.xlane.xlu0 %882
        %v884 = vrcp.pop %v883
        %v885 = vmul.f32 %v880, %v884
        %v886 = vpack.c.bf16 %v885, %v885
        %887 = vrot.lane.b32.xlu0 %v704, 56
        %v888 = vpop.permute.xlu0 %887
        %v890 = vsel %vm714, %v886, 0
        %v893 = vsel %vm779, %v888, 0
        %895 = vmatprep.subr.bf16.mxu0 0
        %896 = vmatpush1.bf16.msra.mxu0 %v893
        %897 = vmatprep.subr.bf16.mxu0 0
        %898 = vmatpush1.bf16.msra.mxu0 0
        %899 = vmatprep.subr.bf16.mxu0 0
        %900 = vmatpush1.bf16.msra.mxu0 0
        %901 = vmatprep.subr.bf16.mxu0 0
        %902 = vmatpush1.bf16.msra.mxu0 0
        %903 = vmatprep.subr.bf16.mxu0 0
        %904 = vmatpush1.bf16.msra.mxu0 0
        %905 = vmatprep.subr.bf16.mxu0 0
        %906 = vmatpush1.bf16.msra.mxu0 0
        %907 = vmatprep.subr.bf16.mxu0 0
        %908 = vmatpush1.bf16.msra.mxu0 0
        %909 = vmatprep.subr.bf16.mxu0 0
        %910 = vmatpush1.bf16.msra.mxu0 0
        %911 = vmatprep.subr.bf16.mxu0 0
        %912 = vmatpush1.bf16.msra.mxu0 0
        %913 = vmatprep.subr.bf16.mxu0 0
        %914 = vmatpush1.bf16.msra.mxu0 0
        %915 = vmatprep.subr.bf16.mxu0 0
        %916 = vmatpush1.bf16.msra.mxu0 0
        %917 = vmatprep.subr.bf16.mxu0 0
        %918 = vmatpush1.bf16.msra.mxu0 0
        %919 = vmatprep.subr.bf16.mxu0 0
        %920 = vmatpush1.bf16.msra.mxu0 0
        %921 = vmatprep.subr.bf16.mxu0 0
        %922 = vmatpush1.bf16.msra.mxu0 0
        %923 = vmatprep.subr.bf16.mxu0 0
        %924 = vmatpush1.bf16.msra.mxu0 0
        %925 = vmatprep.subr.bf16.mxu0 0
        %926 = vmatpush1.bf16.msra.mxu0 0
        %927 = vmatprep.mubr.bf16.mxu0 0
        %928 = vmatmul.mubr.bf16.gmra.mrb[0].mxu0 %v890
        %v929 = vpop.f32.mrb[0].mxu0
        %v930 = vadd.f32 0.0, %v929
        %v931 = vpop.f32.mrb[0].mxu0
        %v932 = vpop.f32.mrb[0].mxu0
        %v933 = vpop.f32.mrb[0].mxu0
        %934 = vdwg.mxu0
        %936 = vrot.lane.b32.xlu0 %v930, 8
        %v937 = vpop.permute.xlu0 %936
        %vm939 = vcmask 130112
        %940 = vst.msk [vmem:[#allocation2] sm:$0xff] %vm939, %v937
        %941 = vrot.lane.b32.xlu0 %v704, 112
        %v942 = vpop.permute.xlu0 %941
        %943 = vrot.lane.b32.xlu0 %v704, 80
        %v944 = vpop.permute.xlu0 %943
        %v946 = vsel %vm714, %v942, 0
        %v949 = vsel %vm714, %v944, 0
        %951 = vmatprep.subr.bf16.mxu0 0
        %952 = vmatpush1.bf16.xpose.msra.mxu0 %v949
        %953 = vmatprep.subr.bf16.mxu0 0
        %954 = vmatpush1.bf16.xpose.msra.mxu0 0
        %955 = vmatprep.subr.bf16.mxu0 0
        %956 = vmatpush1.bf16.xpose.msra.mxu0 0
        %957 = vmatprep.subr.bf16.mxu0 0
        %958 = vmatpush1.bf16.xpose.msra.mxu0 0
        %959 = vmatprep.subr.bf16.mxu0 0
        %960 = vmatpush1.bf16.xpose.msra.mxu0 0
        %961 = vmatprep.subr.bf16.mxu0 0
        %962 = vmatpush1.bf16.xpose.msra.mxu0 0
        %963 = vmatprep.subr.bf16.mxu0 0
        %964 = vmatpush1.bf16.xpose.msra.mxu0 0
        %965 = vmatprep.subr.bf16.mxu0 0
        %966 = vmatpush1.bf16.xpose.msra.mxu0 0
        %967 = vmatprep.subr.bf16.mxu0 0
        %968 = vmatpush1.bf16.xpose.msra.mxu0 0
        %969 = vmatprep.subr.bf16.mxu0 0
        %970 = vmatpush1.bf16.xpose.msra.mxu0 0
        %971 = vmatprep.subr.bf16.mxu0 0
        %972 = vmatpush1.bf16.xpose.msra.mxu0 0
        %973 = vmatprep.subr.bf16.mxu0 0
        %974 = vmatpush1.bf16.xpose.msra.mxu0 0
        %975 = vmatprep.subr.bf16.mxu0 0
        %976 = vmatpush1.bf16.xpose.msra.mxu0 0
        %977 = vmatprep.subr.bf16.mxu0 0
        %978 = vmatpush1.bf16.xpose.msra.mxu0 0
        %979 = vmatprep.subr.bf16.mxu0 0
        %980 = vmatpush1.bf16.xpose.msra.mxu0 0
        %981 = vmatprep.subr.bf16.mxu0 0
        %982 = vmatpush1.bf16.xpose.msra.mxu0 0
        %983 = vmatprep.mubr.bf16.mxu0 0
        %984 = vmatmul.mubr.bf16.gmra.mrb[0].mxu0 %v946
        %v985 = vpop.f32.mrb[0].mxu0
        %v986 = vadd.f32 %v709, %v985
        %v987 = vpop.f32.mrb[0].mxu0
        %v988 = vpop.f32.mrb[0].mxu0
        %v989 = vpop.f32.mrb[0].mxu0
        %990 = vdwg.mxu0
        %v991 = vmul.f32 %v986, 0.17677669
        %v992 = vsel %vm714, %v991, -inf
        %993 = vmax.xlane.f32.xlu0 %v992
        %v994 = vpop.xlane.xlu0 %993
        %v995 = vsub.f32 %v991, %v994
        %v996 = vmul.f32 %v995, 1.442695
        %v997 = vpow.pop %v996
        %v998 = vsel %vm714, %v997, 0.0
        %999 = vadd.xlane.f32.xlu0 %v998
        %v1000 = vpop.xlane.xlu0 %999
        %v1001 = vrcp.pop %v1000
        %v1002 = vmul.f32 %v997, %v1001
        %v1003 = vpack.c.bf16 %v1002, %v1002
        %1004 = vrot.lane.b32.xlu0 %v704, 48
        %v1005 = vpop.permute.xlu0 %1004
        %v1007 = vsel %vm714, %v1003, 0
        %v1010 = vsel %vm779, %v1005, 0
        %1012 = vmatprep.subr.bf16.mxu0 0
        %1013 = vmatpush1.bf16.msra.mxu0 %v1010
        %1014 = vmatprep.subr.bf16.mxu0 0
        %1015 = vmatpush1.bf16.msra.mxu0 0
        %1016 = vmatprep.subr.bf16.mxu0 0
        %1017 = vmatpush1.bf16.msra.mxu0 0
        %1018 = vmatprep.subr.bf16.mxu0 0
        %1019 = vmatpush1.bf16.msra.mxu0 0
        %1020 = vmatprep.subr.bf16.mxu0 0
        %1021 = vmatpush1.bf16.msra.mxu0 0
        %1022 = vmatprep.subr.bf16.mxu0 0
        %1023 = vmatpush1.bf16.msra.mxu0 0
        %1024 = vmatprep.subr.bf16.mxu0 0
        %1025 = vmatpush1.bf16.msra.mxu0 0
        %1026 = vmatprep.subr.bf16.mxu0 0
        %1027 = vmatpush1.bf16.msra.mxu0 0
        %1028 = vmatprep.subr.bf16.mxu0 0
        %1029 = vmatpush1.bf16.msra.mxu0 0
        %1030 = vmatprep.subr.bf16.mxu0 0
        %1031 = vmatpush1.bf16.msra.mxu0 0
        %1032 = vmatprep.subr.bf16.mxu0 0
        %1033 = vmatpush1.bf16.msra.mxu0 0
        %1034 = vmatprep.subr.bf16.mxu0 0
        %1035 = vmatpush1.bf16.msra.mxu0 0
        %1036 = vmatprep.subr.bf16.mxu0 0
        %1037 = vmatpush1.bf16.msra.mxu0 0
        %1038 = vmatprep.subr.bf16.mxu0 0
        %1039 = vmatpush1.bf16.msra.mxu0 0
        %1040 = vmatprep.subr.bf16.mxu0 0
        %1041 = vmatpush1.bf16.msra.mxu0 0
        %1042 = vmatprep.subr.bf16.mxu0 0
        %1043 = vmatpush1.bf16.msra.mxu0 0
        %1044 = vmatprep.mubr.bf16.mxu0 0
        %1045 = vmatmul.mubr.bf16.gmra.mrb[0].mxu0 %v1007
        %v1046 = vpop.f32.mrb[0].mxu0
        %v1047 = vadd.f32 0.0, %v1046
        %v1048 = vpop.f32.mrb[0].mxu0
        %v1049 = vpop.f32.mrb[0].mxu0
        %v1050 = vpop.f32.mrb[0].mxu0
        %1051 = vdwg.mxu0
        %1053 = vrot.lane.b32.xlu0 %v1047, 16
        %v1054 = vpop.permute.xlu0 %1053
        %vm1056 = vcmask 195712
        %1057 = vst.msk [vmem:[#allocation2] sm:$0xff] %vm1056, %v1054
        %1058 = vrot.lane.b32.xlu0 %v704, 104
        %v1059 = vpop.permute.xlu0 %1058
        %1060 = vrot.lane.b32.xlu0 %v704, 72
        %v1061 = vpop.permute.xlu0 %1060
        %v1063 = vsel %vm714, %v1059, 0
        %v1066 = vsel %vm714, %v1061, 0
        %1068 = vmatprep.subr.bf16.mxu0 0
        %1069 = vmatpush1.bf16.xpose.msra.mxu0 %v1066
        %1070 = vmatprep.subr.bf16.mxu0 0
        %1071 = vmatpush1.bf16.xpose.msra.mxu0 0
        %1072 = vmatprep.subr.bf16.mxu0 0
        %1073 = vmatpush1.bf16.xpose.msra.mxu0 0
        %1074 = vmatprep.subr.bf16.mxu0 0
        %1075 = vmatpush1.bf16.xpose.msra.mxu0 0
        %1076 = vmatprep.subr.bf16.mxu0 0
        %1077 = vmatpush1.bf16.xpose.msra.mxu0 0
        %1078 = vmatprep.subr.bf16.mxu0 0
        %1079 = vmatpush1.bf16.xpose.msra.mxu0 0
        %1080 = vmatprep.subr.bf16.mxu0 0
        %1081 = vmatpush1.bf16.xpose.msra.mxu0 0
        %1082 = vmatprep.subr.bf16.mxu0 0
        %1083 = vmatpush1.bf16.xpose.msra.mxu0 0
        %1084 = vmatprep.subr.bf16.mxu0 0
        %1085 = vmatpush1.bf16.xpose.msra.mxu0 0
        %1086 = vmatprep.subr.bf16.mxu0 0
        %1087 = vmatpush1.bf16.xpose.msra.mxu0 0
        %1088 = vmatprep.subr.bf16.mxu0 0
        %1089 = vmatpush1.bf16.xpose.msra.mxu0 0
        %1090 = vmatprep.subr.bf16.mxu0 0
        %1091 = vmatpush1.bf16.xpose.msra.mxu0 0
        %1092 = vmatprep.subr.bf16.mxu0 0
        %1093 = vmatpush1.bf16.xpose.msra.mxu0 0
        %1094 = vmatprep.subr.bf16.mxu0 0
        %1095 = vmatpush1.bf16.xpose.msra.mxu0 0
        %1096 = vmatprep.subr.bf16.mxu0 0
        %1097 = vmatpush1.bf16.xpose.msra.mxu0 0
        %1098 = vmatprep.subr.bf16.mxu0 0
        %1099 = vmatpush1.bf16.xpose.msra.mxu0 0
        %1100 = vmatprep.mubr.bf16.mxu0 0
        %1101 = vmatmul.mubr.bf16.gmra.mrb[0].mxu0 %v1063
        %v1102 = vpop.f32.mrb[0].mxu0
        %v1103 = vadd.f32 %v709, %v1102
        %v1104 = vpop.f32.mrb[0].mxu0
        %v1105 = vpop.f32.mrb[0].mxu0
        %v1106 = vpop.f32.mrb[0].mxu0
        %1107 = vdwg.mxu0
        %v1108 = vmul.f32 %v1103, 0.17677669
        %v1109 = vsel %vm714, %v1108, -inf
        %1110 = vmax.xlane.f32.xlu0 %v1109
        %v1111 = vpop.xlane.xlu0 %1110
        %v1112 = vsub.f32 %v1108, %v1111
        %v1113 = vmul.f32 %v1112, 1.442695
        %v1114 = vpow.pop %v1113
        %v1115 = vsel %vm714, %v1114, 0.0
        %1116 = vadd.xlane.f32.xlu0 %v1115
        %v1117 = vpop.xlane.xlu0 %1116
        %v1118 = vrcp.pop %v1117
        %v1119 = vmul.f32 %v1114, %v1118
        %v1120 = vpack.c.bf16 %v1119, %v1119
        %1121 = vrot.lane.b32.xlu0 %v704, 40
        %v1122 = vpop.permute.xlu0 %1121
        %v1124 = vsel %vm714, %v1120, 0
        %v1127 = vsel %vm779, %v1122, 0
        %1129 = vmatprep.subr.bf16.mxu0 0
        %1130 = vmatpush1.bf16.msra.mxu0 %v1127
        %1131 = vmatprep.subr.bf16.mxu0 0
        %1132 = vmatpush1.bf16.msra.mxu0 0
        %1133 = vmatprep.subr.bf16.mxu0 0
        %1134 = vmatpush1.bf16.msra.mxu0 0
        %1135 = vmatprep.subr.bf16.mxu0 0
        %1136 = vmatpush1.bf16.msra.mxu0 0
        %1137 = vmatprep.subr.bf16.mxu0 0
        %1138 = vmatpush1.bf16.msra.mxu0 0
        %1139 = vmatprep.subr.bf16.mxu0 0
        %1140 = vmatpush1.bf16.msra.mxu0 0
        %1141 = vmatprep.subr.bf16.mxu0 0
        %1142 = vmatpush1.bf16.msra.mxu0 0
        %1143 = vmatprep.subr.bf16.mxu0 0
        %1144 = vmatpush1.bf16.msra.mxu0 0
        %1145 = vmatprep.subr.bf16.mxu0 0
        %1146 = vmatpush1.bf16.msra.mxu0 0
        %1147 = vmatprep.subr.bf16.mxu0 0
        %1148 = vmatpush1.bf16.msra.mxu0 0
        %1149 = vmatprep.subr.bf16.mxu0 0
        %1150 = vmatpush1.bf16.msra.mxu0 0
        %1151 = vmatprep.subr.bf16.mxu0 0
        %1152 = vmatpush1.bf16.msra.mxu0 0
        %1153 = vmatprep.subr.bf16.mxu0 0
        %1154 = vmatpush1.bf16.msra.mxu0 0
        %1155 = vmatprep.subr.bf16.mxu0 0
        %1156 = vmatpush1.bf16.msra.mxu0 0
        %1157 = vmatprep.subr.bf16.mxu0 0
        %1158 = vmatpush1.bf16.msra.mxu0 0
        %1159 = vmatprep.subr.bf16.mxu0 0
        %1160 = vmatpush1.bf16.msra.mxu0 0
        %1161 = vmatprep.mubr.bf16.mxu0 0
        %1162 = vmatmul.mubr.bf16.gmra.mrb[0].mxu0 %v1124
        %v1163 = vpop.f32.mrb[0].mxu0
        %v1164 = vadd.f32 0.0, %v1163
        %v1165 = vpop.f32.mrb[0].mxu0
        %v1166 = vpop.f32.mrb[0].mxu0
        %v1167 = vpop.f32.mrb[0].mxu0
        %1168 = vdwg.mxu0
        %1170 = vrot.lane.b32.xlu0 %v1164, 24
        %v1171 = vpop.permute.xlu0 %1170
        %vm1173 = vcmask 261312
        %1174 = vst.msk [vmem:[#allocation2] sm:$0xff] %vm1173, %v1171
        %v1175 = vld [vmem:[#allocation2] sm:$0xff]
        %v1176 = vpack.c.bf16 %v1175, %v1175
        %v1177 = vld [vmem:[%s608] sm:$0xf]
        %v1178 = vld [vmem:[%s608 + $0x4] sm:$0xf]
        %v1179 = vld [vmem:[%s608 + $0x8] sm:$0xf]
        %v1180 = vld [vmem:[%s608 + $0xc] sm:$0xf]
        %v1181 = vld [vmem:[%s611] sm:$0x1]
        %v1183 = vlaneseq
        %v1184 = vshrl.u32 %v1183, 7
        %v1185 = vsub.s32 0, %v1184
        %v1186 = vrot.slane %v1181, %v1185
        %v1192 = vunpack.c.l.b16 %v1177
        %v1193 = vunpack.c.l.b16 %v1178
        %v1194 = vunpack.c.l.b16 %v1179
        %v1195 = vunpack.c.l.b16 %v1180
        %v1196 = vpack.c.b16 %v1193, %v1192
        %v1197 = vpack.c.b16 %v1195, %v1194
        %v1201 = vsel %vm660, %v1176, 0
        %1203 = vmatprep.subr.bf16.mxu0 0
        %1204 = vmatpush1.bf16.msra.mxu0 %v1196
        %1205 = vmatprep.subr.bf16.mxu0 0
        %1206 = vmatpush1.bf16.msra.mxu0 %v1197
        %1207 = vmatprep.subr.bf16.mxu0 0
        %1208 = vmatpush1.bf16.msra.mxu0 0
        %1209 = vmatprep.subr.bf16.mxu0 0
        %1210 = vmatpush1.bf16.msra.mxu0 0
        %1211 = vmatprep.subr.bf16.mxu0 0
        %1212 = vmatpush1.bf16.msra.mxu0 0
        %1213 = vmatprep.subr.bf16.mxu0 0
        %1214 = vmatpush1.bf16.msra.mxu0 0
        %1215 = vmatprep.subr.bf16.mxu0 0
        %1216 = vmatpush1.bf16.msra.mxu0 0
        %1217 = vmatprep.subr.bf16.mxu0 0
        %1218 = vmatpush1.bf16.msra.mxu0 0
        %1219 = vmatprep.subr.bf16.mxu0 0
        %1220 = vmatpush1.bf16.msra.mxu0 0
        %1221 = vmatprep.subr.bf16.mxu0 0
        %1222 = vmatpush1.bf16.msra.mxu0 0
        %1223 = vmatprep.subr.bf16.mxu0 0
        %1224 = vmatpush1.bf16.msra.mxu0 0
        %1225 = vmatprep.subr.bf16.mxu0 0
        %1226 = vmatpush1.bf16.msra.mxu0 0
        %1227 = vmatprep.subr.bf16.mxu0 0
        %1228 = vmatpush1.bf16.msra.mxu0 0
        %1229 = vmatprep.subr.bf16.mxu0 0
        %1230 = vmatpush1.bf16.msra.mxu0 0
        %1231 = vmatprep.subr.bf16.mxu0 0
        %1232 = vmatpush1.bf16.msra.mxu0 0
        %1233 = vmatprep.subr.bf16.mxu0 0
        %1234 = vmatpush1.bf16.msra.mxu0 0
        %1235 = vmatprep.mubr.bf16.mxu0 0
        %1236 = vmatmul.mubr.bf16.gmra.mrb[0].mxu0 %v1201
        %v1237 = vpop.f32.mrb[0].mxu0
        %v1238 = vadd.f32 %v1186, %v1237
        %v1239 = vpop.f32.mrb[0].mxu0
        %v1240 = vpop.f32.mrb[0].mxu0
        %v1241 = vpop.f32.mrb[0].mxu0
        %1242 = vdwg.mxu0
        %v1243 = vadd.f32 %v1238, %v641
        %v1244 = vsel %vm660, %v1243, 0.0
        %1245 = vadd.xlane.f32.xlu0 %v1244
        %v1246 = vpop.xlane.xlu0 %1245
        %v1247 = vrcp.pop 32.0
        %v1248 = vmul.f32 %v1246, %v1247
        %v1249 = vsub.f32 %v1243, %v1248
        %v1250 = vmul.f32 %v1249, %v1249
        %v1251 = vsel %vm660, %v1250, 0.0
        %1252 = vadd.xlane.f32.xlu0 %v1251
        %v1253 = vpop.xlane.xlu0 %1252
        %v1254 = vmul.f32 %v1253, %v1247
        %v1255 = vadd.f32 %v1254, 1e-05
        %v1256 = vrsqrt.pop %v1255
        %v1257 = vmul.f32 %v1249, %v1256
        %v1258 = vld [vmem:[%s614] sm:$0x1]
        %v1260 = vlaneseq
        %v1261 = vshrl.u32 %v1260, 7
        %v1262 = vsub.s32 0, %v1261
        %v1263 = vrot.slane %v1258, %v1262
        %v1265 = vmul.f32 %v1257, %v1263
        %v1266 = vld [vmem:[%s617] sm:$0x1]
        %v1268 = vlaneseq
        %v1269 = vshrl.u32 %v1268, 7
        %v1270 = vsub.s32 0, %v1269
        %v1271 = vrot.slane %v1266, %v1270
        %v1273 = vadd.f32 %v1265, %v1271
        %v1274 = vpack.c.bf16 %v1273, %v1273
        %v1275 = vld [vmem:[%s622] sm:$0xf]
        %v1276 = vld [vmem:[%s622 + $0x4] sm:$0xf]
        %v1277 = vld [vmem:[%s622 + $0x8] sm:$0xf]
        %v1278 = vld [vmem:[%s622 + $0xc] sm:$0xf]
        %v1279 = vld [vmem:[%s625] sm:$0x1]
        %v1281 = vlaneseq
        %v1282 = vshrl.u32 %v1281, 7
        %v1283 = vsub.s32 0, %v1282
        %v1284 = vrot.slane %v1279, %v1283
        %v1290 = vunpack.c.l.b16 %v1275
        %v1291 = vunpack.c.l.b16 %v1276
        %v1292 = vunpack.c.l.b16 %v1277
        %v1293 = vunpack.c.l.b16 %v1278
        %v1294 = vpack.c.b16 %v1291, %v1290
        %v1295 = vpack.c.b16 %v1293, %v1292
        %v1299 = vsel %vm660, %v1274, 0
        %1301 = vmatprep.subr.bf16.mxu0 0
        %1302 = vmatpush1.bf16.msra.mxu0 %v1294
        %1303 = vmatprep.subr.bf16.mxu0 0
        %1304 = vmatpush1.bf16.msra.mxu0 %v1295
        %1305 = vmatprep.subr.bf16.mxu0 0
        %1306 = vmatpush1.bf16.msra.mxu0 0
        %1307 = vmatprep.subr.bf16.mxu0 0
        %1308 = vmatpush1.bf16.msra.mxu0 0
        %1309 = vmatprep.subr.bf16.mxu0 0
        %1310 = vmatpush1.bf16.msra.mxu0 0
        %1311 = vmatprep.subr.bf16.mxu0 0
        %1312 = vmatpush1.bf16.msra.mxu0 0
        %1313 = vmatprep.subr.bf16.mxu0 0
        %1314 = vmatpush1.bf16.msra.mxu0 0
        %1315 = vmatprep.subr.bf16.mxu0 0
        %1316 = vmatpush1.bf16.msra.mxu0 0
        %1317 = vmatprep.subr.bf16.mxu0 0
        %1318 = vmatpush1.bf16.msra.mxu0 0
        %1319 = vmatprep.subr.bf16.mxu0 0
        %1320 = vmatpush1.bf16.msra.mxu0 0
        %1321 = vmatprep.subr.bf16.mxu0 0
        %1322 = vmatpush1.bf16.msra.mxu0 0
        %1323 = vmatprep.subr.bf16.mxu0 0
        %1324 = vmatpush1.bf16.msra.mxu0 0
        %1325 = vmatprep.subr.bf16.mxu0 0
        %1326 = vmatpush1.bf16.msra.mxu0 0
        %1327 = vmatprep.subr.bf16.mxu0 0
        %1328 = vmatpush1.bf16.msra.mxu0 0
        %1329 = vmatprep.subr.bf16.mxu0 0
        %1330 = vmatpush1.bf16.msra.mxu0 0
        %1331 = vmatprep.subr.bf16.mxu0 0
        %1332 = vmatpush1.bf16.msra.mxu0 0
        %1333 = vmatprep.mubr.bf16.mxu0 0
        %1334 = vmatmul.mubr.bf16.gmra.mrb[0].mxu0 %v1299
        %v1335 = vpop.f32.mrb[0].mxu0
        %v1336 = vadd.f32 %v1284, %v1335
        %v1337 = vpop.f32.mrb[0].mxu0
        %v1338 = vpop.f32.mrb[0].mxu0
        %v1339 = vpop.f32.mrb[0].mxu0
        %1340 = vdwg.mxu0
        %v1341 = vmax.f32 %v1336, 0.0
        %v1342 = vpack.c.bf16 %v1341, %v1341
        %v1343 = vld [vmem:[%s630] sm:$0xf]
        %v1344 = vld [vmem:[%s630 + $0x4] sm:$0xf]
        %v1345 = vld [vmem:[%s630 + $0x8] sm:$0xf]
        %v1346 = vld [vmem:[%s630 + $0xc] sm:$0xf]
        %v1347 = vld [vmem:[%s630 + $0x10] sm:$0xf]
        %v1348 = vld [vmem:[%s630 + $0x14] sm:$0xf]
        %v1349 = vld [vmem:[%s630 + $0x18] sm:$0xf]
        %v1350 = vld [vmem:[%s630 + $0x1c] sm:$0xf]
        %v1351 = vld [vmem:[%s630 + $0x20] sm:$0xf]
        %v1352 = vld [vmem:[%s630 + $0x24] sm:$0xf]
        %v1353 = vld [vmem:[%s630 + $0x28] sm:$0xf]
        %v1354 = vld [vmem:[%s630 + $0x2c] sm:$0xf]
        %v1355 = vld [vmem:[%s630 + $0x30] sm:$0xf]
        %v1356 = vld [vmem:[%s630 + $0x34] sm:$0xf]
        %v1357 = vld [vmem:[%s630 + $0x38] sm:$0xf]
        %v1358 = vld [vmem:[%s630 + $0x3c] sm:$0xf]
        %v1359 = vld [vmem:[%s633] sm:$0x1]
        %v1361 = vlaneseq
        %v1362 = vshrl.u32 %v1361, 7
        %v1363 = vsub.s32 0, %v1362
        %v1364 = vrot.slane %v1359, %v1363
        %v1382 = vunpack.c.l.b16 %v1343
        %v1383 = vunpack.c.l.b16 %v1344
        %v1384 = vunpack.c.l.b16 %v1345
        %v1385 = vunpack.c.l.b16 %v1346
        %v1386 = vunpack.c.l.b16 %v1347
        %v1387 = vunpack.c.l.b16 %v1348
        %v1388 = vunpack.c.l.b16 %v1349
        %v1389 = vunpack.c.l.b16 %v1350
        %v1390 = vunpack.c.l.b16 %v1351
        %v1391 = vunpack.c.l.b16 %v1352
        %v1392 = vunpack.c.l.b16 %v1353
        %v1393 = vunpack.c.l.b16 %v1354
        %v1394 = vunpack.c.l.b16 %v1355
        %v1395 = vunpack.c.l.b16 %v1356
        %v1396 = vunpack.c.l.b16 %v1357
        %v1397 = vunpack.c.l.b16 %v1358
        %v1398 = vpack.c.b16 %v1383, %v1382
        %v1399 = vpack.c.b16 %v1385, %v1384
        %v1400 = vpack.c.b16 %v1387, %v1386
        %v1401 = vpack.c.b16 %v1389, %v1388
        %v1402 = vpack.c.b16 %v1391, %v1390
        %v1403 = vpack.c.b16 %v1393, %v1392
        %v1404 = vpack.c.b16 %v1395, %v1394
        %v1405 = vpack.c.b16 %v1397, %v1396
        %1414 = vmatprep.subr.bf16.mxu0 0
        %1415 = vmatpush1.bf16.msra.mxu0 %v1398
        %1416 = vmatprep.subr.bf16.mxu0 0
        %1417 = vmatpush1.bf16.msra.mxu0 %v1399
        %1418 = vmatprep.subr.bf16.mxu0 0
        %1419 = vmatpush1.bf16.msra.mxu0 %v1400
        %1420 = vmatprep.subr.bf16.mxu0 0
        %1421 = vmatpush1.bf16.msra.mxu0 %v1401
        %1422 = vmatprep.subr.bf16.mxu0 0
        %1423 = vmatpush1.bf16.msra.mxu0 %v1402
        %1424 = vmatprep.subr.bf16.mxu0 0
        %1425 = vmatpush1.bf16.msra.mxu0 %v1403
        %1426 = vmatprep.subr.bf16.mxu0 0
        %1427 = vmatpush1.bf16.msra.mxu0 %v1404
        %1428 = vmatprep.subr.bf16.mxu0 0
        %1429 = vmatpush1.bf16.msra.mxu0 %v1405
        %1430 = vmatprep.subr.bf16.mxu0 0
        %1431 = vmatpush1.bf16.msra.mxu0 0
        %1432 = vmatprep.subr.bf16.mxu0 0
        %1433 = vmatpush1.bf16.msra.mxu0 0
        %1434 = vmatprep.subr.bf16.mxu0 0
        %1435 = vmatpush1.bf16.msra.mxu0 0
        %1436 = vmatprep.subr.bf16.mxu0 0
        %1437 = vmatpush1.bf16.msra.mxu0 0
        %1438 = vmatprep.subr.bf16.mxu0 0
        %1439 = vmatpush1.bf16.msra.mxu0 0
        %1440 = vmatprep.subr.bf16.mxu0 0
        %1441 = vmatpush1.bf16.msra.mxu0 0
        %1442 = vmatprep.subr.bf16.mxu0 0
        %1443 = vmatpush1.bf16.msra.mxu0 0
        %1444 = vmatprep.subr.bf16.mxu0 0
        %1445 = vmatpush1.bf16.msra.mxu0 0
        %1446 = vmatprep.mubr.bf16.mxu0 0
        %1447 = vmatmul.mubr.bf16.gmra.mrb[0].mxu0 %v1342
        %v1448 = vpop.f32.mrb[0].mxu0
        %v1449 = vadd.f32 %v1364, %v1448
        %v1450 = vpop.f32.mrb[0].mxu0
        %v1451 = vpop.f32.mrb[0].mxu0
        %v1452 = vpop.f32.mrb[0].mxu0
        %1453 = vdwg.mxu0
        %v1454 = vadd.f32 %v1273, %v1449
        %v1455 = vsel %vm660, %v1454, 0.0
        %1456 = vadd.xlane.f32.xlu0 %v1455
        %v1457 = vpop.xlane.xlu0 %1456
        %v1458 = vmul.f32 %v1457, %v1247
        %v1459 = vsub.f32 %v1454, %v1458
        %v1460 = vmul.f32 %v1459, %v1459
        %v1461 = vsel %vm660, %v1460, 0.0
        %1462 = vadd.xlane.f32.xlu0 %v1461
        %v1463 = vpop.xlane.xlu0 %1462
        %v1464 = vmul.f32 %v1463, %v1247
        %v1465 = vadd.f32 %v1464, 1e-05
        %v1466 = vrsqrt.pop %v1465
        %v1467 = vmul.f32 %v1459, %v1466
        %v1468 = vld [vmem:[%s636] sm:$0x1]
        %v1470 = vlaneseq
        %v1471 = vshrl.u32 %v1470, 7
        %v1472 = vsub.s32 0, %v1471
        %v1473 = vrot.slane %v1468, %v1472
        %v1475 = vmul.f32 %v1467, %v1473
        %v1476 = vld [vmem:[%s639] sm:$0x1]
        %v1478 = vlaneseq
        %v1479 = vshrl.u32 %v1478, 7
        %v1480 = vsub.s32 0, %v1479
        %v1481 = vrot.slane %v1476, %v1480
        %v1483 = vadd.f32 %v1475, %v1481
        %1484 = vst.msk [vmem:[%s591] sm:$0xff] %vm660, %v1483
        %s1485 = sand.u32 %s385, 1
        %s1486 = scalar_lea.sflag [#allocation4], %s1485
        %s1487 = sand.u32 %s385, 1
        %s1488 = smul.addr %s1487, 8
        %s1489 = scalar_lea.vmem [#allocation3], %s1488
        // Predicated region
        $region73: #{tpu_custom_call.1} parent=71 // pred_check
          %p1490 = pneg %p395
        $region74: #{tpu_custom_call.1} parent=71 // pred_check_branch
          %1492 = sbr.rel (%p1490) target = $region76
        $region75: #{tpu_custom_call.1} parent=71 // pred_region
          %s1494 = ssub.s32 128, 128
          %1495 = vsyncadd %s1486, %s1494
          %s1496 = smul.addr %s31, 128
          %s1497 = scalar_lea.hbm %s13, %s1496
          %s1499 = sshll.u32 %s1489, 4
          %s1500 = int_to_ptr.vmem [resolvable:$true] %s1499
          %1502 = dma.vmem_to_hbm [thread:$0]  %s1500, 128, %s1497, %s1486
        $region76: #{tpu_custom_call.1} parent=71 // pred_fallthru
          _
      $region72: #{tpu_custom_call.1} parent=5 // pred_fallthru
        _
      %p1503 = scmp.le.s32.totalorder 2, %s22
      // Predicated region
      $region77: #{tpu_custom_call.1} parent=5 // pred_check
        %p1504 = pneg %p1503
      $region78: #{tpu_custom_call.1} parent=5 // pred_check_branch
        %1506 = sbr.rel (%p1504) target = $region80
      $region79: #{tpu_custom_call.1} parent=5 // pred_region
        %s1507 = ssub.s32 %s22, 2
        // Predicated region
        $region81: #{tpu_custom_call.1} parent=79 // pred_check
          %p1508 = pneg %p401
        $region82: #{tpu_custom_call.1} parent=79 // pred_check_branch
          %1510 = sbr.rel (%p1508) target = $region84
        $region83: #{tpu_custom_call.1} parent=79 // pred_region
          %s1511 = sand.u32 %s386, 1
          %s1512 = scalar_lea.sflag [#allocation4], %s1511
          %s1513 = sand.u32 %s386, 1
          %s1514 = smul.addr %s1513, 8
          %s1515 = scalar_lea.vmem [#allocation3], %s1514
          %1516 = dma.done %s1512, 128
        $region84: #{tpu_custom_call.1} parent=79 // pred_fallthru
          _
      $region80: #{tpu_custom_call.1} parent=5 // pred_fallthru
        _
    $region6: #{tpu_custom_call.1} parent=1 // loop_footer
      %s26 = sadd.s32 1, %s22
    $region7: #{tpu_custom_call.1} parent=1 // loop_footer_branch
      %21 = sbr.rel target = $region3
    $region8: #{tpu_custom_call.1} parent=1 // loop_exit
      _
    %1517 = vsyncpa [#allocation4], 1
    %s1518 = scalar_lea.sflag [#allocation4], 1
    %1519 = vsyncpa %s1518, 1

</llo_original>
